<compile_context>
chip_gen: v7x
topology: tpu7x:2x2x1
jax: 0.10.0
libtpu: 0.0.40
codegen_flags: <defaults>
</compile_context>

<pallas_src>
import math

import jax
import jax.numpy as jnp
from jax.experimental import pallas as pl
from jax.experimental.pallas import tpu as pltpu

# ----------------------------- config (toy DeiT) ----------------------------
IMAGE_SIZE   = 16
PATCH_SIZE   = 8
NUM_CHANNELS = 3
HIDDEN       = 32
NUM_HEADS    = 4
NUM_LAYERS   = 2
INTERMEDIATE = 4 * HIDDEN              # transformer MLP width (128)
FC_SIZE      = 64                      # config.fully_connected_size
NUM_CLASSES  = 10                      # config.num_classes
LN_EPS       = 1e-12                   # DeiTConfig.layer_norm_eps
BATCH        = 2

NUM_PATCHES  = (IMAGE_SIZE // PATCH_SIZE) ** 2          # 4
SEQ          = NUM_PATCHES + 2                          # + [CLS] + [DIST]
PATCH_DIM    = NUM_CHANNELS * PATCH_SIZE * PATCH_SIZE   # 192
HEAD_DIM     = HIDDEN // NUM_HEADS                      # 8
B_SEQ        = BATCH * SEQ                              # 12
BH_SEQ       = NUM_HEADS * B_SEQ                        # 48 (rows of fused attention)
OUT_PAD      = 128                                      # padded class dim (lane-dense store)
NEG          = -1e30

# row layout of the (HIDDEN-lane) weight slab: [patch_w | w2(layer0) | w2(layer1) | add]
W32_PW_OFF   = 0
W32_W2_OFF   = PATCH_DIM                                # 192
W32_ADD_OFF  = PATCH_DIM + NUM_LAYERS * INTERMEDIATE    # 448
W32_ROWS     = W32_ADD_OFF + B_SEQ                      # 460

# row layout of the classifier-head slab
HEAD_VEC_OFF = HIDDEN + OUT_PAD                         # 160
HEAD_ROWS    = HEAD_VEC_OFF + 4                         # 164


# ----------------------------- kernel helpers -------------------------------
def _layernorm(x, gamma, beta):
    mu = jnp.mean(x, axis=-1, keepdims=True)
    var = jnp.mean((x - mu) ** 2, axis=-1, keepdims=True)
    return (x - mu) * jax.lax.rsqrt(var + LN_EPS) * gamma + beta


# --------------------------- fused Pallas kernel ----------------------------
def deit_fused_kernel(patches_ref, w32_ref, mask_ref, wlyr_ref, vec_ref,
                      head_ref, out_ref):
    # ---- patch embedding: (B*SEQ, PATCH_DIM) @ (PATCH_DIM, H) + additive rows
    # (CLS/DIST rows of `patches` are zero; `add` carries tok+pos / pos+conv-bias)
    pw  = w32_ref[W32_PW_OFF:W32_PW_OFF + PATCH_DIM, :]
    add = w32_ref[W32_ADD_OFF:W32_ADD_OFF + B_SEQ, :]
    x = jnp.dot(patches_ref[...], pw, preferred_element_type=jnp.float32) + add

    mask_add = mask_ref[...]                    # (48,48): 0 on (head,image) diag blocks, -1e30 off
    scale = 1.0 / math.sqrt(HEAD_DIM)

    # ---- transformer encoder layers (batch + heads folded into matmul M)
    for l in range(NUM_LAYERS):                 # static unroll
        wl  = wlyr_ref[l]                       # (H, 3H + H + INTERMEDIATE)
        vec = vec_ref[l]                        # (8, 128) packed LN params / biases
        wqkv = wl[:, 0:3 * HIDDEN]              # cols ordered (head, {q,k,v}, head_dim)
        wo   = wl[:, 3 * HIDDEN:4 * HIDDEN]
        w1   = wl[:, 4 * HIDDEN:4 * HIDDEN + INTERMEDIATE]
        w2   = w32_ref[W32_W2_OFF + l * INTERMEDIATE:
                       W32_W2_OFF + (l + 1) * INTERMEDIATE, :]
        ln1g, ln1b = vec[0:1, 0:HIDDEN], vec[1:2, 0:HIDDEN]
        bqkv       = vec[2:3, 0:3 * HIDDEN]
        bo         = vec[3:4, 0:HIDDEN]
        ln2g, ln2b = vec[4:5, 0:HIDDEN], vec[5:6, 0:HIDDEN]
        b1         = vec[6:7, 0:INTERMEDIATE]
        b2         = vec[7:8, 0:HIDDEN]

        # -- attention --------------------------------------------------------
        h = _layernorm(x, ln1g, ln1b)
        qkv = jnp.dot(h, wqkv, preferred_element_type=jnp.float32) + bqkv   # (B*SEQ, 3H)
        # gather heads into the M dimension: rows ordered (head, image, seq)
        qkv_h = jnp.concatenate(
            [qkv[:, hd * 3 * HEAD_DIM:(hd + 1) * 3 * HEAD_DIM]
             for hd in range(NUM_HEADS)], axis=0)                           # (48, 24)
        q = qkv_h[:, 0:HEAD_DIM]
        k = qkv_h[:, HEAD_DIM:2 * HEAD_DIM]
        v = qkv_h[:, 2 * HEAD_DIM:3 * HEAD_DIM]

        s = jax.lax.dot_general(q, k, (((1,), (1,)), ((), ())),
                                preferred_element_type=jnp.float32) * scale  # (48, 48)
        s = s + mask_add                          # block-diagonal mask (per head, per image)
        s = s - jnp.max(s, axis=-1, keepdims=True)
        p = jnp.exp(s)
        p = p * pl.reciprocal(jnp.sum(p, axis=-1, keepdims=True), approx=True)
        ctx_h = jnp.dot(p, v, preferred_element_type=jnp.float32)            # (48, HEAD_DIM)
        # fold heads back onto lanes: (B*SEQ, HIDDEN), cols ordered (head, head_dim)
        ctx = jnp.concatenate(
            [ctx_h[hd * B_SEQ:(hd + 1) * B_SEQ, :] for hd in range(NUM_HEADS)],
            axis=1)
        # attention / hidden dropout are 0.0 in DeiTConfig defaults
        x = x + jnp.dot(ctx, wo, preferred_element_type=jnp.float32) + bo

        # -- MLP ---------------------------------------------------------------
        h2 = _layernorm(x, ln2g, ln2b)
        h2 = jnp.dot(h2, w1, preferred_element_type=jnp.float32) + b1
        # TODO(synk): HF DeiT uses exact erf GELU; tanh approximation used for Mosaic portability.
        h2 = jax.nn.gelu(h2, approximate=True)
        x = x + jnp.dot(h2, w2, preferred_element_type=jnp.float32) + b2

    # ---- classifier head on ALL rows (same MXU pass as CLS-only) -------------
    fc1w = head_ref[0:HIDDEN, :]                                 # (H, 128) zero-padded
    fc2w = head_ref[HIDDEN:HIDDEN + OUT_PAD, :]                  # (128, 128) zero-padded
    hvec = head_ref[HEAD_VEC_OFF:HEAD_VEC_OFF + 4, :]
    lnfg, lnfb = hvec[0:1, 0:HIDDEN], hvec[1:2, 0:HIDDEN]
    fc1b, fc2b = hvec[2:3, :], hvec[3:4, :]                      # fc2b padded with -1e30

    c = _layernorm(x, lnfg, lnfb)                                # final layernorm
    hfc = jnp.maximum(jnp.dot(c, fc1w, preferred_element_type=jnp.float32) + fc1b, 0.0)
    # nn.Dropout(0.3) is identity in inference mode.
    logits = jnp.dot(hfc, fc2w, preferred_element_type=jnp.float32) + fc2b   # (B*SEQ, 128)
    m = jnp.max(logits, axis=-1, keepdims=True)                  # log_softmax(dim=1) (exact)
    lse = m + jnp.log(jnp.sum(jnp.exp(logits - m), axis=-1, keepdims=True))
    out_ref[...] = logits - lse                                  # padded cols ~ -1e30, sliced off


# ------------------------------ wrapper --------------------------------------
def deit_forward(x_nchw, slabs):
    """Full DeiTClassifier.forward in one pallas_call."""
    B, C, Hs, Ws = x_nchw.shape
    assert B == BATCH and C == NUM_CHANNELS and Hs == IMAGE_SIZE and Ws == IMAGE_SIZE
    gh, gw = Hs // PATCH_SIZE, Ws // PATCH_SIZE
    # Conv2d(patch, stride=patch) == im2col + matmul; extraction is host glue,
    # the matmul runs inside the kernel.
    p = x_nchw.reshape(B, C, gh, PATCH_SIZE, gw, PATCH_SIZE)
    p = p.transpose(0, 2, 4, 1, 3, 5).reshape(B, NUM_PATCHES, PATCH_DIM)
    # (B*SEQ, PATCH_DIM) with zero rows at the [CLS]/[DIST] positions
    patches_full = jnp.zeros((B, SEQ, PATCH_DIM), jnp.float32).at[:, 2:, :].set(p)
    patches_full = patches_full.reshape(B * SEQ, PATCH_DIM)

    vmem = pl.BlockSpec(memory_space=pltpu.MemorySpace.VMEM)
    out = pl.pallas_call(
        deit_fused_kernel,
        out_shape=jax.ShapeDtypeStruct((B * SEQ, OUT_PAD), jnp.float32),
        in_specs=[vmem] * 6,
        out_specs=vmem,
        # No grid: all weights + activations (~260 KB) stay VMEM-resident for the
        # whole forward; batch/heads are folded into the matmul M dimension.
    )(patches_full, slabs["w32"], slabs["mask"], slabs["wlyr"],
      slabs["vec"], slabs["head"])
    # CLS row of each image, real class columns
    return out[0::SEQ, :NUM_CLASSES]


# ----------------------------- parameter init -------------------------------
def init_params(key):
    keys = iter(jax.random.split(key, 64))

    def nrm(shape, scale=0.02):
        return (scale * jax.random.normal(next(keys), shape)).astype(jnp.float32)

    zeros = lambda s: jnp.zeros(s, jnp.float32)
    ones  = lambda s: jnp.ones(s, jnp.float32)

    params = {
        "patch_w": nrm((PATCH_DIM, HIDDEN)),
        "patch_b": zeros((1, HIDDEN)),
        "tokens":  nrm((2, HIDDEN)),            # [CLS], [DIST]
        "pos":     nrm((SEQ, HIDDEN)),
        "lnf_g":   ones((1, HIDDEN)),
        "lnf_b":   zeros((1, HIDDEN)),
        "fc1_w":   nrm((HIDDEN, FC_SIZE)),
        "fc1_b":   zeros((1, FC_SIZE)),
        "fc2_w":   nrm((FC_SIZE, NUM_CLASSES)),
        "fc2_b":   zeros((1, NUM_CLASSES)),
        "layers":  [],
    }
    for _ in range(NUM_LAYERS):
        params["layers"].append({
            "ln1_g": ones((1, HIDDEN)),  "ln1_b": zeros((1, HIDDEN)),
            "wq": nrm((HIDDEN, HIDDEN)), "wk": nrm((HIDDEN, HIDDEN)), "wv": nrm((HIDDEN, HIDDEN)),
            "bq": zeros((1, HIDDEN)),    "bk": zeros((1, HIDDEN)),    "bv": zeros((1, HIDDEN)),
            "wo": nrm((HIDDEN, HIDDEN)), "bo": zeros((1, HIDDEN)),
            "ln2_g": ones((1, HIDDEN)),  "ln2_b": zeros((1, HIDDEN)),
            "w1": nrm((HIDDEN, INTERMEDIATE)), "b1": zeros((1, INTERMEDIATE)),
            "w2": nrm((INTERMEDIATE, HIDDEN)), "b2": zeros((1, HIDDEN)),
        })
    return params


def _row(v, width, fill=0.0):
    v = jnp.asarray(v, jnp.float32).reshape(1, -1)
    return jnp.pad(v, ((0, 0), (0, width - v.shape[1])), constant_values=fill)


def pack_params(p):
    """Pack natural params into a few VMEM-friendly slabs (cuts ~24 DMAs to 6)."""
    # additive embedding rows: tok+pos for CLS/DIST, pos+conv-bias for patch rows
    tokpos    = p["tokens"] + p["pos"][0:2]
    patch_add = p["pos"][2:] + p["patch_b"]
    add = jnp.tile(jnp.concatenate([tokpos, patch_add], axis=0), (BATCH, 1))   # (B*SEQ, H)

    # HIDDEN-lane slab: [patch_w | w2 per layer | add]
    w32 = jnp.concatenate([p["patch_w"]]
                          + [lp["w2"] for lp in p["layers"]]
                          + [add], axis=0)                                      # (460, 32)

    wlyr, vecs = [], []
    for lp in p["layers"]:
        # host-side per-head column permutation of the fused QKV weight/bias:
        # cols ordered (head, {q,k,v}, head_dim) so the kernel gathers heads with one concat
        wblk, bblk = [], []
        for h in range(NUM_HEADS):
            sl = slice(h * HEAD_DIM, (h + 1) * HEAD_DIM)
            wblk += [lp["wq"][:, sl], lp["wk"][:, sl], lp["wv"][:, sl]]
            bblk += [lp["bq"][:, sl], lp["bk"][:, sl], lp["bv"][:, sl]]
        wqkv = jnp.concatenate(wblk, axis=1)                                   # (H, 3H)
        bqkv = jnp.concatenate(bblk, axis=1)                                   # (1, 3H)
        wlyr.append(jnp.concatenate([wqkv, lp["wo"], lp["w1"]], axis=1))       # (H, 256)
        vecs.append(jnp.concatenate([
            _row(lp["ln1_g"], 128), _row(lp["ln1_b"], 128),
            _row(bqkv, 128),        _row(lp["bo"], 128),
            _row(lp["ln2_g"], 128), _row(lp["ln2_b"], 128),
            _row(lp["b1"], 128),    _row(lp["b2"], 128)], axis=0))             # (8, 128)

    # classifier-head slab, class dim padded to 128 lanes (unmasked final store);
    # padded classes get logits of -1e30 via the padded fc2 bias.
    fc1w = jnp.pad(p["fc1_w"], ((0, 0), (0, OUT_PAD - FC_SIZE)))
    fc2w = jnp.pad(p["fc2_w"], ((0, OUT_PAD - FC_SIZE), (0, OUT_PAD - NUM_CLASSES)))
    head = jnp.concatenate([
        fc1w, fc2w,
        _row(p["lnf_g"], OUT_PAD), _row(p["lnf_b"], OUT_PAD),
        _row(p["fc1_b"], OUT_PAD), _row(p["fc2_b"], OUT_PAD, fill=NEG)], axis=0)  # (164, 128)

    # block-diagonal additive attention mask over (head, image) groups of SEQ rows
    gid = jnp.repeat(jnp.arange(NUM_HEADS * BATCH), SEQ)                       # (48,)
    mask = jnp.where(gid[:, None] == gid[None, :], 0.0, NEG).astype(jnp.float32)

    return {"w32": w32, "wlyr": jnp.stack(wlyr), "vec": jnp.stack(vecs),
            "head": head, "mask": mask}


# --------------------------------- main --------------------------------------
if __name__ == "__main__":
    key = jax.random.PRNGKey(0)
    kx, kp = jax.random.split(key)
    x = jax.random.normal(kx, (BATCH, NUM_CHANNELS, IMAGE_SIZE, IMAGE_SIZE),
                          dtype=jnp.float32)
    params = init_params(kp)
    slabs = pack_params(params)

    fwd = jax.jit(deit_forward)
    log_probs = jax.block_until_ready(fwd(x, slabs))

    assert log_probs.shape == (BATCH, NUM_CLASSES)
    # log_softmax rows must exponentiate-sum to 1
    assert bool(jnp.allclose(jnp.exp(log_probs).sum(axis=1), 1.0, atol=1e-4))
    print("KERNEL_OK")
</pallas_src>

<mosaic_0001>
module attributes {stable_mosaic.version = 11 : i64} {
  func.func @deit_fused_kernel(%arg0: memref<12x192xf32, #tpu.memory_space<vmem>>, %arg1: memref<460x32xf32, #tpu.memory_space<vmem>>, %arg2: memref<48x48xf32, #tpu.memory_space<vmem>>, %arg3: memref<2x32x256xf32, #tpu.memory_space<vmem>>, %arg4: memref<2x8x128xf32, #tpu.memory_space<vmem>>, %arg5: memref<164x128xf32, #tpu.memory_space<vmem>>, %arg6: memref<12x128xf32, #tpu.memory_space<vmem>>) attributes {dimension_semantics = [], scalar_prefetch = 0 : i64, scratch_operands = 0 : i64, tpu.core_type = #tpu.core_type<tc>} {
    %c0 = arith.constant 0 : index
    %c0_0 = arith.constant 0 : index
    %0 = vector.load %arg1[%c0, %c0_0] : memref<460x32xf32, #tpu.memory_space<vmem>>, vector<192x32xf32>
    %c448 = arith.constant 448 : index
    %c0_1 = arith.constant 0 : index
    %1 = vector.load %arg1[%c448, %c0_1] : memref<460x32xf32, #tpu.memory_space<vmem>>, vector<12x32xf32>
    %c0_2 = arith.constant 0 : index
    %c0_3 = arith.constant 0 : index
    %2 = vector.load %arg0[%c0_2, %c0_3] : memref<12x192xf32, #tpu.memory_space<vmem>>, vector<12x192xf32>
    %cst = arith.constant dense<0.000000e+00> : vector<12x32xf32>
    %3 = tpu.matmul %2, %0, %cst {dimension_numbers = #tpu.dot_dimension_numbers<[1], [0], [0], [1], [0, 0, 1, 1], [], []>} : vector<12x192xf32>, vector<192x32xf32>, vector<12x32xf32> -> vector<12x32xf32>
    %4 = arith.addf %3, %1 : vector<12x32xf32>
    %c0_4 = arith.constant 0 : index
    %c0_5 = arith.constant 0 : index
    %5 = vector.load %arg2[%c0_4, %c0_5] : memref<48x48xf32, #tpu.memory_space<vmem>>, vector<48x48xf32>
    %c0_6 = arith.constant 0 : index
    %c0_7 = arith.constant 0 : index
    %c0_8 = arith.constant 0 : index
    %6 = vector.load %arg3[%c0_6, %c0_7, %c0_8] : memref<2x32x256xf32, #tpu.memory_space<vmem>>, vector<1x32x256xf32>
    %7 = vector.shape_cast %6 : vector<1x32x256xf32> to vector<32x256xf32>
    %c0_9 = arith.constant 0 : index
    %c0_10 = arith.constant 0 : index
    %c0_11 = arith.constant 0 : index
    %8 = vector.load %arg4[%c0_9, %c0_10, %c0_11] : memref<2x8x128xf32, #tpu.memory_space<vmem>>, vector<1x8x128xf32>
    %9 = vector.shape_cast %8 : vector<1x8x128xf32> to vector<8x128xf32>
    %10 = vector.extract_strided_slice %7 {offsets = [0, 0], sizes = [32, 96], strides = [1, 1]} : vector<32x256xf32> to vector<32x96xf32>
    %11 = vector.extract_strided_slice %7 {offsets = [0, 96], sizes = [32, 32], strides = [1, 1]} : vector<32x256xf32> to vector<32x32xf32>
    %12 = vector.extract_strided_slice %7 {offsets = [0, 128], sizes = [32, 128], strides = [1, 1]} : vector<32x256xf32> to vector<32x128xf32>
    %c192 = arith.constant 192 : index
    %c0_12 = arith.constant 0 : index
    %13 = vector.load %arg1[%c192, %c0_12] : memref<460x32xf32, #tpu.memory_space<vmem>>, vector<128x32xf32>
    %14 = vector.extract_strided_slice %9 {offsets = [0, 0], sizes = [1, 32], strides = [1, 1]} : vector<8x128xf32> to vector<1x32xf32>
    %15 = vector.extract_strided_slice %9 {offsets = [1, 0], sizes = [1, 32], strides = [1, 1]} : vector<8x128xf32> to vector<1x32xf32>
    %16 = vector.extract_strided_slice %9 {offsets = [2, 0], sizes = [1, 96], strides = [1, 1]} : vector<8x128xf32> to vector<1x96xf32>
    %17 = vector.extract_strided_slice %9 {offsets = [3, 0], sizes = [1, 32], strides = [1, 1]} : vector<8x128xf32> to vector<1x32xf32>
    %18 = vector.extract_strided_slice %9 {offsets = [4, 0], sizes = [1, 32], strides = [1, 1]} : vector<8x128xf32> to vector<1x32xf32>
    %19 = vector.extract_strided_slice %9 {offsets = [5, 0], sizes = [1, 32], strides = [1, 1]} : vector<8x128xf32> to vector<1x32xf32>
    %20 = vector.extract_strided_slice %9 {offsets = [6, 0], sizes = [1, 128], strides = [1, 1]} : vector<8x128xf32> to vector<1x128xf32>
    %21 = vector.extract_strided_slice %9 {offsets = [7, 0], sizes = [1, 32], strides = [1, 1]} : vector<8x128xf32> to vector<1x32xf32>
    %cst_13 = arith.constant dense<0.000000e+00> : vector<12xf32>
    %22 = vector.multi_reduction <add>, %4, %cst_13 [1] : vector<12x32xf32> to vector<12xf32>
    %23 = vector.shape_cast %22 : vector<12xf32> to vector<12x1xf32>
    %cst_14 = arith.constant 3.200000e+01 : f32
    %24 = vector.broadcast %cst_14 : f32 to vector<12x1xf32>
    %25 = arith.divf %23, %24 : vector<12x1xf32>
    %26 = vector.broadcast %25 : vector<12x1xf32> to vector<12x32xf32>
    %27 = arith.subf %4, %26 : vector<12x32xf32>
    %28 = arith.mulf %27, %27 : vector<12x32xf32>
    %cst_15 = arith.constant dense<0.000000e+00> : vector<12xf32>
    %29 = vector.multi_reduction <add>, %28, %cst_15 [1] : vector<12x32xf32> to vector<12xf32>
    %30 = vector.shape_cast %29 : vector<12xf32> to vector<12x1xf32>
    %cst_16 = arith.constant 3.200000e+01 : f32
    %31 = vector.broadcast %cst_16 : f32 to vector<12x1xf32>
    %32 = arith.divf %30, %31 : vector<12x1xf32>
    %33 = vector.broadcast %25 : vector<12x1xf32> to vector<12x32xf32>
    %34 = arith.subf %4, %33 : vector<12x32xf32>
    %cst_17 = arith.constant 9.99999996E-13 : f32
    %35 = vector.broadcast %cst_17 : f32 to vector<12x1xf32>
    %36 = arith.addf %32, %35 : vector<12x1xf32>
    %37 = math.rsqrt %36 : vector<12x1xf32>
    %38 = vector.broadcast %37 : vector<12x1xf32> to vector<12x32xf32>
    %39 = arith.mulf %34, %38 : vector<12x32xf32>
    %40 = vector.broadcast %14 : vector<1x32xf32> to vector<12x32xf32>
    %41 = arith.mulf %39, %40 : vector<12x32xf32>
    %42 = vector.broadcast %15 : vector<1x32xf32> to vector<12x32xf32>
    %43 = arith.addf %41, %42 : vector<12x32xf32>
    %cst_18 = arith.constant dense<0.000000e+00> : vector<12x96xf32>
    %44 = tpu.matmul %43, %10, %cst_18 {dimension_numbers = #tpu.dot_dimension_numbers<[1], [0], [0], [1], [0, 0, 1, 1], [], []>} : vector<12x32xf32>, vector<32x96xf32>, vector<12x96xf32> -> vector<12x96xf32>
    %45 = vector.broadcast %16 : vector<1x96xf32> to vector<12x96xf32>
    %46 = arith.addf %44, %45 : vector<12x96xf32>
    %47 = vector.extract_strided_slice %46 {offsets = [0, 0], sizes = [12, 24], strides = [1, 1]} : vector<12x96xf32> to vector<12x24xf32>
    %48 = vector.extract_strided_slice %46 {offsets = [0, 24], sizes = [12, 24], strides = [1, 1]} : vector<12x96xf32> to vector<12x24xf32>
    %49 = vector.extract_strided_slice %46 {offsets = [0, 48], sizes = [12, 24], strides = [1, 1]} : vector<12x96xf32> to vector<12x24xf32>
    %50 = vector.extract_strided_slice %46 {offsets = [0, 72], sizes = [12, 24], strides = [1, 1]} : vector<12x96xf32> to vector<12x24xf32>
    %51 = tpu.concatenate %47, %48, %49, %50 in 0 : vector<12x24xf32>, vector<12x24xf32>, vector<12x24xf32>, vector<12x24xf32> -> vector<48x24xf32>
    %52 = vector.extract_strided_slice %51 {offsets = [0, 0], sizes = [48, 8], strides = [1, 1]} : vector<48x24xf32> to vector<48x8xf32>
    %53 = vector.extract_strided_slice %51 {offsets = [0, 8], sizes = [48, 8], strides = [1, 1]} : vector<48x24xf32> to vector<48x8xf32>
    %54 = vector.extract_strided_slice %51 {offsets = [0, 16], sizes = [48, 8], strides = [1, 1]} : vector<48x24xf32> to vector<48x8xf32>
    %cst_19 = arith.constant dense<0.000000e+00> : vector<48x48xf32>
    %55 = tpu.matmul %52, %53, %cst_19 {dimension_numbers = #tpu.dot_dimension_numbers<[1], [1], [0], [0], [0, 0, 1, 0], [], []>} : vector<48x8xf32>, vector<48x8xf32>, vector<48x48xf32> -> vector<48x48xf32>
    %cst_20 = arith.constant 0.353553385 : f32
    %56 = vector.broadcast %cst_20 : f32 to vector<48x48xf32>
    %57 = arith.mulf %55, %56 : vector<48x48xf32>
    %58 = arith.addf %57, %5 : vector<48x48xf32>
    %cst_21 = arith.constant dense<0xFF800000> : vector<48xf32>
    %59 = vector.multi_reduction <maximumf>, %58, %cst_21 [1] : vector<48x48xf32> to vector<48xf32>
    %60 = vector.shape_cast %59 : vector<48xf32> to vector<48x1xf32>
    %61 = vector.broadcast %60 : vector<48x1xf32> to vector<48x48xf32>
    %62 = arith.subf %58, %61 : vector<48x48xf32>
    %63 = math.exp %62 : vector<48x48xf32>
    %cst_22 = arith.constant dense<0.000000e+00> : vector<48xf32>
    %64 = vector.multi_reduction <add>, %63, %cst_22 [1] : vector<48x48xf32> to vector<48xf32>
    %65 = vector.shape_cast %64 : vector<48xf32> to vector<48x1xf32>
    %66 = tpu.reciprocal %65 {approx = true} : vector<48x1xf32> -> vector<48x1xf32>
    %67 = vector.broadcast %66 : vector<48x1xf32> to vector<48x48xf32>
    %68 = arith.mulf %63, %67 : vector<48x48xf32>
    %cst_23 = arith.constant dense<0.000000e+00> : vector<48x8xf32>
    %69 = tpu.matmul %68, %54, %cst_23 {dimension_numbers = #tpu.dot_dimension_numbers<[1], [0], [0], [1], [0, 0, 1, 1], [], []>} : vector<48x48xf32>, vector<48x8xf32>, vector<48x8xf32> -> vector<48x8xf32>
    %70 = vector.extract_strided_slice %69 {offsets = [0, 0], sizes = [12, 8], strides = [1, 1]} : vector<48x8xf32> to vector<12x8xf32>
    %71 = vector.extract_strided_slice %69 {offsets = [12, 0], sizes = [12, 8], strides = [1, 1]} : vector<48x8xf32> to vector<12x8xf32>
    %72 = vector.extract_strided_slice %69 {offsets = [24, 0], sizes = [12, 8], strides = [1, 1]} : vector<48x8xf32> to vector<12x8xf32>
    %73 = vector.extract_strided_slice %69 {offsets = [36, 0], sizes = [12, 8], strides = [1, 1]} : vector<48x8xf32> to vector<12x8xf32>
    %74 = tpu.concatenate %70, %71, %72, %73 in 1 : vector<12x8xf32>, vector<12x8xf32>, vector<12x8xf32>, vector<12x8xf32> -> vector<12x32xf32>
    %cst_24 = arith.constant dense<0.000000e+00> : vector<12x32xf32>
    %75 = tpu.matmul %74, %11, %cst_24 {dimension_numbers = #tpu.dot_dimension_numbers<[1], [0], [0], [1], [0, 0, 1, 1], [], []>} : vector<12x32xf32>, vector<32x32xf32>, vector<12x32xf32> -> vector<12x32xf32>
    %76 = arith.addf %4, %75 : vector<12x32xf32>
    %77 = vector.broadcast %17 : vector<1x32xf32> to vector<12x32xf32>
    %78 = arith.addf %76, %77 : vector<12x32xf32>
    %cst_25 = arith.constant dense<0.000000e+00> : vector<12xf32>
    %79 = vector.multi_reduction <add>, %78, %cst_25 [1] : vector<12x32xf32> to vector<12xf32>
    %80 = vector.shape_cast %79 : vector<12xf32> to vector<12x1xf32>
    %cst_26 = arith.constant 3.200000e+01 : f32
    %81 = vector.broadcast %cst_26 : f32 to vector<12x1xf32>
    %82 = arith.divf %80, %81 : vector<12x1xf32>
    %83 = vector.broadcast %82 : vector<12x1xf32> to vector<12x32xf32>
    %84 = arith.subf %78, %83 : vector<12x32xf32>
    %85 = arith.mulf %84, %84 : vector<12x32xf32>
    %cst_27 = arith.constant dense<0.000000e+00> : vector<12xf32>
    %86 = vector.multi_reduction <add>, %85, %cst_27 [1] : vector<12x32xf32> to vector<12xf32>
    %87 = vector.shape_cast %86 : vector<12xf32> to vector<12x1xf32>
    %cst_28 = arith.constant 3.200000e+01 : f32
    %88 = vector.broadcast %cst_28 : f32 to vector<12x1xf32>
    %89 = arith.divf %87, %88 : vector<12x1xf32>
    %90 = vector.broadcast %82 : vector<12x1xf32> to vector<12x32xf32>
    %91 = arith.subf %78, %90 : vector<12x32xf32>
    %cst_29 = arith.constant 9.99999996E-13 : f32
    %92 = vector.broadcast %cst_29 : f32 to vector<12x1xf32>
    %93 = arith.addf %89, %92 : vector<12x1xf32>
    %94 = math.rsqrt %93 : vector<12x1xf32>
    %95 = vector.broadcast %94 : vector<12x1xf32> to vector<12x32xf32>
    %96 = arith.mulf %91, %95 : vector<12x32xf32>
    %97 = vector.broadcast %18 : vector<1x32xf32> to vector<12x32xf32>
    %98 = arith.mulf %96, %97 : vector<12x32xf32>
    %99 = vector.broadcast %19 : vector<1x32xf32> to vector<12x32xf32>
    %100 = arith.addf %98, %99 : vector<12x32xf32>
    %cst_30 = arith.constant dense<0.000000e+00> : vector<12x128xf32>
    %101 = tpu.matmul %100, %12, %cst_30 {dimension_numbers = #tpu.dot_dimension_numbers<[1], [0], [0], [1], [0, 0, 1, 1], [], []>} : vector<12x32xf32>, vector<32x128xf32>, vector<12x128xf32> -> vector<12x128xf32>
    %102 = vector.broadcast %20 : vector<1x128xf32> to vector<12x128xf32>
    %103 = arith.addf %101, %102 : vector<12x128xf32>
    %104 = arith.mulf %103, %103 : vector<12x128xf32>
    %105 = arith.mulf %103, %104 : vector<12x128xf32>
    %cst_31 = arith.constant 4.471500e-02 : f32
    %106 = vector.broadcast %cst_31 : f32 to vector<12x128xf32>
    %107 = arith.mulf %106, %105 : vector<12x128xf32>
    %108 = arith.addf %103, %107 : vector<12x128xf32>
    %cst_32 = arith.constant 0.797884583 : f32
    %109 = vector.broadcast %cst_32 : f32 to vector<12x128xf32>
    %110 = arith.mulf %109, %108 : vector<12x128xf32>
    %111 = math.tanh %110 : vector<12x128xf32>
    %cst_33 = arith.constant 1.000000e+00 : f32
    %112 = vector.broadcast %cst_33 : f32 to vector<12x128xf32>
    %113 = arith.addf %112, %111 : vector<12x128xf32>
    %cst_34 = arith.constant 5.000000e-01 : f32
    %114 = vector.broadcast %cst_34 : f32 to vector<12x128xf32>
    %115 = arith.mulf %114, %113 : vector<12x128xf32>
    %116 = arith.mulf %103, %115 : vector<12x128xf32>
    %cst_35 = arith.constant dense<0.000000e+00> : vector<12x32xf32>
    %117 = tpu.matmul %116, %13, %cst_35 {dimension_numbers = #tpu.dot_dimension_numbers<[1], [0], [0], [1], [0, 0, 1, 1], [], []>} : vector<12x128xf32>, vector<128x32xf32>, vector<12x32xf32> -> vector<12x32xf32>
    %118 = arith.addf %78, %117 : vector<12x32xf32>
    %119 = vector.broadcast %21 : vector<1x32xf32> to vector<12x32xf32>
    %120 = arith.addf %118, %119 : vector<12x32xf32>
    %c1 = arith.constant 1 : index
    %c0_36 = arith.constant 0 : index
    %c0_37 = arith.constant 0 : index
    %121 = vector.load %arg3[%c1, %c0_36, %c0_37] : memref<2x32x256xf32, #tpu.memory_space<vmem>>, vector<1x32x256xf32>
    %122 = vector.shape_cast %121 : vector<1x32x256xf32> to vector<32x256xf32>
    %c1_38 = arith.constant 1 : index
    %c0_39 = arith.constant 0 : index
    %c0_40 = arith.constant 0 : index
    %123 = vector.load %arg4[%c1_38, %c0_39, %c0_40] : memref<2x8x128xf32, #tpu.memory_space<vmem>>, vector<1x8x128xf32>
    %124 = vector.shape_cast %123 : vector<1x8x128xf32> to vector<8x128xf32>
    %125 = vector.extract_strided_slice %122 {offsets = [0, 0], sizes = [32, 96], strides = [1, 1]} : vector<32x256xf32> to vector<32x96xf32>
    %126 = vector.extract_strided_slice %122 {offsets = [0, 96], sizes = [32, 32], strides = [1, 1]} : vector<32x256xf32> to vector<32x32xf32>
    %127 = vector.extract_strided_slice %122 {offsets = [0, 128], sizes = [32, 128], strides = [1, 1]} : vector<32x256xf32> to vector<32x128xf32>
    %c320 = arith.constant 320 : index
    %c0_41 = arith.constant 0 : index
    %128 = vector.load %arg1[%c320, %c0_41] : memref<460x32xf32, #tpu.memory_space<vmem>>, vector<128x32xf32>
    %129 = vector.extract_strided_slice %124 {offsets = [0, 0], sizes = [1, 32], strides = [1, 1]} : vector<8x128xf32> to vector<1x32xf32>
    %130 = vector.extract_strided_slice %124 {offsets = [1, 0], sizes = [1, 32], strides = [1, 1]} : vector<8x128xf32> to vector<1x32xf32>
    %131 = vector.extract_strided_slice %124 {offsets = [2, 0], sizes = [1, 96], strides = [1, 1]} : vector<8x128xf32> to vector<1x96xf32>
    %132 = vector.extract_strided_slice %124 {offsets = [3, 0], sizes = [1, 32], strides = [1, 1]} : vector<8x128xf32> to vector<1x32xf32>
    %133 = vector.extract_strided_slice %124 {offsets = [4, 0], sizes = [1, 32], strides = [1, 1]} : vector<8x128xf32> to vector<1x32xf32>
    %134 = vector.extract_strided_slice %124 {offsets = [5, 0], sizes = [1, 32], strides = [1, 1]} : vector<8x128xf32> to vector<1x32xf32>
    %135 = vector.extract_strided_slice %124 {offsets = [6, 0], sizes = [1, 128], strides = [1, 1]} : vector<8x128xf32> to vector<1x128xf32>
    %136 = vector.extract_strided_slice %124 {offsets = [7, 0], sizes = [1, 32], strides = [1, 1]} : vector<8x128xf32> to vector<1x32xf32>
    %cst_42 = arith.constant dense<0.000000e+00> : vector<12xf32>
    %137 = vector.multi_reduction <add>, %120, %cst_42 [1] : vector<12x32xf32> to vector<12xf32>
    %138 = vector.shape_cast %137 : vector<12xf32> to vector<12x1xf32>
    %cst_43 = arith.constant 3.200000e+01 : f32
    %139 = vector.broadcast %cst_43 : f32 to vector<12x1xf32>
    %140 = arith.divf %138, %139 : vector<12x1xf32>
    %141 = vector.broadcast %140 : vector<12x1xf32> to vector<12x32xf32>
    %142 = arith.subf %120, %141 : vector<12x32xf32>
    %143 = arith.mulf %142, %142 : vector<12x32xf32>
    %cst_44 = arith.constant dense<0.000000e+00> : vector<12xf32>
    %144 = vector.multi_reduction <add>, %143, %cst_44 [1] : vector<12x32xf32> to vector<12xf32>
    %145 = vector.shape_cast %144 : vector<12xf32> to vector<12x1xf32>
    %cst_45 = arith.constant 3.200000e+01 : f32
    %146 = vector.broadcast %cst_45 : f32 to vector<12x1xf32>
    %147 = arith.divf %145, %146 : vector<12x1xf32>
    %148 = vector.broadcast %140 : vector<12x1xf32> to vector<12x32xf32>
    %149 = arith.subf %120, %148 : vector<12x32xf32>
    %cst_46 = arith.constant 9.99999996E-13 : f32
    %150 = vector.broadcast %cst_46 : f32 to vector<12x1xf32>
    %151 = arith.addf %147, %150 : vector<12x1xf32>
    %152 = math.rsqrt %151 : vector<12x1xf32>
    %153 = vector.broadcast %152 : vector<12x1xf32> to vector<12x32xf32>
    %154 = arith.mulf %149, %153 : vector<12x32xf32>
    %155 = vector.broadcast %129 : vector<1x32xf32> to vector<12x32xf32>
    %156 = arith.mulf %154, %155 : vector<12x32xf32>
    %157 = vector.broadcast %130 : vector<1x32xf32> to vector<12x32xf32>
    %158 = arith.addf %156, %157 : vector<12x32xf32>
    %cst_47 = arith.constant dense<0.000000e+00> : vector<12x96xf32>
    %159 = tpu.matmul %158, %125, %cst_47 {dimension_numbers = #tpu.dot_dimension_numbers<[1], [0], [0], [1], [0, 0, 1, 1], [], []>} : vector<12x32xf32>, vector<32x96xf32>, vector<12x96xf32> -> vector<12x96xf32>
    %160 = vector.broadcast %131 : vector<1x96xf32> to vector<12x96xf32>
    %161 = arith.addf %159, %160 : vector<12x96xf32>
    %162 = vector.extract_strided_slice %161 {offsets = [0, 0], sizes = [12, 24], strides = [1, 1]} : vector<12x96xf32> to vector<12x24xf32>
    %163 = vector.extract_strided_slice %161 {offsets = [0, 24], sizes = [12, 24], strides = [1, 1]} : vector<12x96xf32> to vector<12x24xf32>
    %164 = vector.extract_strided_slice %161 {offsets = [0, 48], sizes = [12, 24], strides = [1, 1]} : vector<12x96xf32> to vector<12x24xf32>
    %165 = vector.extract_strided_slice %161 {offsets = [0, 72], sizes = [12, 24], strides = [1, 1]} : vector<12x96xf32> to vector<12x24xf32>
    %166 = tpu.concatenate %162, %163, %164, %165 in 0 : vector<12x24xf32>, vector<12x24xf32>, vector<12x24xf32>, vector<12x24xf32> -> vector<48x24xf32>
    %167 = vector.extract_strided_slice %166 {offsets = [0, 0], sizes = [48, 8], strides = [1, 1]} : vector<48x24xf32> to vector<48x8xf32>
    %168 = vector.extract_strided_slice %166 {offsets = [0, 8], sizes = [48, 8], strides = [1, 1]} : vector<48x24xf32> to vector<48x8xf32>
    %169 = vector.extract_strided_slice %166 {offsets = [0, 16], sizes = [48, 8], strides = [1, 1]} : vector<48x24xf32> to vector<48x8xf32>
    %cst_48 = arith.constant dense<0.000000e+00> : vector<48x48xf32>
    %170 = tpu.matmul %167, %168, %cst_48 {dimension_numbers = #tpu.dot_dimension_numbers<[1], [1], [0], [0], [0, 0, 1, 0], [], []>} : vector<48x8xf32>, vector<48x8xf32>, vector<48x48xf32> -> vector<48x48xf32>
    %cst_49 = arith.constant 0.353553385 : f32
    %171 = vector.broadcast %cst_49 : f32 to vector<48x48xf32>
    %172 = arith.mulf %170, %171 : vector<48x48xf32>
    %173 = arith.addf %172, %5 : vector<48x48xf32>
    %cst_50 = arith.constant dense<0xFF800000> : vector<48xf32>
    %174 = vector.multi_reduction <maximumf>, %173, %cst_50 [1] : vector<48x48xf32> to vector<48xf32>
    %175 = vector.shape_cast %174 : vector<48xf32> to vector<48x1xf32>
    %176 = vector.broadcast %175 : vector<48x1xf32> to vector<48x48xf32>
    %177 = arith.subf %173, %176 : vector<48x48xf32>
    %178 = math.exp %177 : vector<48x48xf32>
    %cst_51 = arith.constant dense<0.000000e+00> : vector<48xf32>
    %179 = vector.multi_reduction <add>, %178, %cst_51 [1] : vector<48x48xf32> to vector<48xf32>
    %180 = vector.shape_cast %179 : vector<48xf32> to vector<48x1xf32>
    %181 = tpu.reciprocal %180 {approx = true} : vector<48x1xf32> -> vector<48x1xf32>
    %182 = vector.broadcast %181 : vector<48x1xf32> to vector<48x48xf32>
    %183 = arith.mulf %178, %182 : vector<48x48xf32>
    %cst_52 = arith.constant dense<0.000000e+00> : vector<48x8xf32>
    %184 = tpu.matmul %183, %169, %cst_52 {dimension_numbers = #tpu.dot_dimension_numbers<[1], [0], [0], [1], [0, 0, 1, 1], [], []>} : vector<48x48xf32>, vector<48x8xf32>, vector<48x8xf32> -> vector<48x8xf32>
    %185 = vector.extract_strided_slice %184 {offsets = [0, 0], sizes = [12, 8], strides = [1, 1]} : vector<48x8xf32> to vector<12x8xf32>
    %186 = vector.extract_strided_slice %184 {offsets = [12, 0], sizes = [12, 8], strides = [1, 1]} : vector<48x8xf32> to vector<12x8xf32>
    %187 = vector.extract_strided_slice %184 {offsets = [24, 0], sizes = [12, 8], strides = [1, 1]} : vector<48x8xf32> to vector<12x8xf32>
    %188 = vector.extract_strided_slice %184 {offsets = [36, 0], sizes = [12, 8], strides = [1, 1]} : vector<48x8xf32> to vector<12x8xf32>
    %189 = tpu.concatenate %185, %186, %187, %188 in 1 : vector<12x8xf32>, vector<12x8xf32>, vector<12x8xf32>, vector<12x8xf32> -> vector<12x32xf32>
    %cst_53 = arith.constant dense<0.000000e+00> : vector<12x32xf32>
    %190 = tpu.matmul %189, %126, %cst_53 {dimension_numbers = #tpu.dot_dimension_numbers<[1], [0], [0], [1], [0, 0, 1, 1], [], []>} : vector<12x32xf32>, vector<32x32xf32>, vector<12x32xf32> -> vector<12x32xf32>
    %191 = arith.addf %120, %190 : vector<12x32xf32>
    %192 = vector.broadcast %132 : vector<1x32xf32> to vector<12x32xf32>
    %193 = arith.addf %191, %192 : vector<12x32xf32>
    %cst_54 = arith.constant dense<0.000000e+00> : vector<12xf32>
    %194 = vector.multi_reduction <add>, %193, %cst_54 [1] : vector<12x32xf32> to vector<12xf32>
    %195 = vector.shape_cast %194 : vector<12xf32> to vector<12x1xf32>
    %cst_55 = arith.constant 3.200000e+01 : f32
    %196 = vector.broadcast %cst_55 : f32 to vector<12x1xf32>
    %197 = arith.divf %195, %196 : vector<12x1xf32>
    %198 = vector.broadcast %197 : vector<12x1xf32> to vector<12x32xf32>
    %199 = arith.subf %193, %198 : vector<12x32xf32>
    %200 = arith.mulf %199, %199 : vector<12x32xf32>
    %cst_56 = arith.constant dense<0.000000e+00> : vector<12xf32>
    %201 = vector.multi_reduction <add>, %200, %cst_56 [1] : vector<12x32xf32> to vector<12xf32>
    %202 = vector.shape_cast %201 : vector<12xf32> to vector<12x1xf32>
    %cst_57 = arith.constant 3.200000e+01 : f32
    %203 = vector.broadcast %cst_57 : f32 to vector<12x1xf32>
    %204 = arith.divf %202, %203 : vector<12x1xf32>
    %205 = vector.broadcast %197 : vector<12x1xf32> to vector<12x32xf32>
    %206 = arith.subf %193, %205 : vector<12x32xf32>
    %cst_58 = arith.constant 9.99999996E-13 : f32
    %207 = vector.broadcast %cst_58 : f32 to vector<12x1xf32>
    %208 = arith.addf %204, %207 : vector<12x1xf32>
    %209 = math.rsqrt %208 : vector<12x1xf32>
    %210 = vector.broadcast %209 : vector<12x1xf32> to vector<12x32xf32>
    %211 = arith.mulf %206, %210 : vector<12x32xf32>
    %212 = vector.broadcast %133 : vector<1x32xf32> to vector<12x32xf32>
    %213 = arith.mulf %211, %212 : vector<12x32xf32>
    %214 = vector.broadcast %134 : vector<1x32xf32> to vector<12x32xf32>
    %215 = arith.addf %213, %214 : vector<12x32xf32>
    %cst_59 = arith.constant dense<0.000000e+00> : vector<12x128xf32>
    %216 = tpu.matmul %215, %127, %cst_59 {dimension_numbers = #tpu.dot_dimension_numbers<[1], [0], [0], [1], [0, 0, 1, 1], [], []>} : vector<12x32xf32>, vector<32x128xf32>, vector<12x128xf32> -> vector<12x128xf32>
    %217 = vector.broadcast %135 : vector<1x128xf32> to vector<12x128xf32>
    %218 = arith.addf %216, %217 : vector<12x128xf32>
    %219 = arith.mulf %218, %218 : vector<12x128xf32>
    %220 = arith.mulf %218, %219 : vector<12x128xf32>
    %cst_60 = arith.constant 4.471500e-02 : f32
    %221 = vector.broadcast %cst_60 : f32 to vector<12x128xf32>
    %222 = arith.mulf %221, %220 : vector<12x128xf32>
    %223 = arith.addf %218, %222 : vector<12x128xf32>
    %cst_61 = arith.constant 0.797884583 : f32
    %224 = vector.broadcast %cst_61 : f32 to vector<12x128xf32>
    %225 = arith.mulf %224, %223 : vector<12x128xf32>
    %226 = math.tanh %225 : vector<12x128xf32>
    %cst_62 = arith.constant 1.000000e+00 : f32
    %227 = vector.broadcast %cst_62 : f32 to vector<12x128xf32>
    %228 = arith.addf %227, %226 : vector<12x128xf32>
    %cst_63 = arith.constant 5.000000e-01 : f32
    %229 = vector.broadcast %cst_63 : f32 to vector<12x128xf32>
    %230 = arith.mulf %229, %228 : vector<12x128xf32>
    %231 = arith.mulf %218, %230 : vector<12x128xf32>
    %cst_64 = arith.constant dense<0.000000e+00> : vector<12x32xf32>
    %232 = tpu.matmul %231, %128, %cst_64 {dimension_numbers = #tpu.dot_dimension_numbers<[1], [0], [0], [1], [0, 0, 1, 1], [], []>} : vector<12x128xf32>, vector<128x32xf32>, vector<12x32xf32> -> vector<12x32xf32>
    %233 = arith.addf %193, %232 : vector<12x32xf32>
    %234 = vector.broadcast %136 : vector<1x32xf32> to vector<12x32xf32>
    %235 = arith.addf %233, %234 : vector<12x32xf32>
    %c0_65 = arith.constant 0 : index
    %c0_66 = arith.constant 0 : index
    %236 = vector.load %arg5[%c0_65, %c0_66] : memref<164x128xf32, #tpu.memory_space<vmem>>, vector<32x128xf32>
    %c32 = arith.constant 32 : index
    %c0_67 = arith.constant 0 : index
    %237 = vector.load %arg5[%c32, %c0_67] : memref<164x128xf32, #tpu.memory_space<vmem>>, vector<128x128xf32>
    %c160 = arith.constant 160 : index
    %c0_68 = arith.constant 0 : index
    %238 = vector.load %arg5[%c160, %c0_68] : memref<164x128xf32, #tpu.memory_space<vmem>>, vector<4x128xf32>
    %239 = vector.extract_strided_slice %238 {offsets = [0, 0], sizes = [1, 32], strides = [1, 1]} : vector<4x128xf32> to vector<1x32xf32>
    %240 = vector.extract_strided_slice %238 {offsets = [1, 0], sizes = [1, 32], strides = [1, 1]} : vector<4x128xf32> to vector<1x32xf32>
    %241 = vector.extract_strided_slice %238 {offsets = [2, 0], sizes = [1, 128], strides = [1, 1]} : vector<4x128xf32> to vector<1x128xf32>
    %242 = vector.extract_strided_slice %238 {offsets = [3, 0], sizes = [1, 128], strides = [1, 1]} : vector<4x128xf32> to vector<1x128xf32>
    %cst_69 = arith.constant dense<0.000000e+00> : vector<12xf32>
    %243 = vector.multi_reduction <add>, %235, %cst_69 [1] : vector<12x32xf32> to vector<12xf32>
    %244 = vector.shape_cast %243 : vector<12xf32> to vector<12x1xf32>
    %cst_70 = arith.constant 3.200000e+01 : f32
    %245 = vector.broadcast %cst_70 : f32 to vector<12x1xf32>
    %246 = arith.divf %244, %245 : vector<12x1xf32>
    %247 = vector.broadcast %246 : vector<12x1xf32> to vector<12x32xf32>
    %248 = arith.subf %235, %247 : vector<12x32xf32>
    %249 = arith.mulf %248, %248 : vector<12x32xf32>
    %cst_71 = arith.constant dense<0.000000e+00> : vector<12xf32>
    %250 = vector.multi_reduction <add>, %249, %cst_71 [1] : vector<12x32xf32> to vector<12xf32>
    %251 = vector.shape_cast %250 : vector<12xf32> to vector<12x1xf32>
    %cst_72 = arith.constant 3.200000e+01 : f32
    %252 = vector.broadcast %cst_72 : f32 to vector<12x1xf32>
    %253 = arith.divf %251, %252 : vector<12x1xf32>
    %254 = vector.broadcast %246 : vector<12x1xf32> to vector<12x32xf32>
    %255 = arith.subf %235, %254 : vector<12x32xf32>
    %cst_73 = arith.constant 9.99999996E-13 : f32
    %256 = vector.broadcast %cst_73 : f32 to vector<12x1xf32>
    %257 = arith.addf %253, %256 : vector<12x1xf32>
    %258 = math.rsqrt %257 : vector<12x1xf32>
    %259 = vector.broadcast %258 : vector<12x1xf32> to vector<12x32xf32>
    %260 = arith.mulf %255, %259 : vector<12x32xf32>
    %261 = vector.broadcast %239 : vector<1x32xf32> to vector<12x32xf32>
    %262 = arith.mulf %260, %261 : vector<12x32xf32>
    %263 = vector.broadcast %240 : vector<1x32xf32> to vector<12x32xf32>
    %264 = arith.addf %262, %263 : vector<12x32xf32>
    %cst_74 = arith.constant dense<0.000000e+00> : vector<12x128xf32>
    %265 = tpu.matmul %264, %236, %cst_74 {dimension_numbers = #tpu.dot_dimension_numbers<[1], [0], [0], [1], [0, 0, 1, 1], [], []>} : vector<12x32xf32>, vector<32x128xf32>, vector<12x128xf32> -> vector<12x128xf32>
    %266 = vector.broadcast %241 : vector<1x128xf32> to vector<12x128xf32>
    %267 = arith.addf %265, %266 : vector<12x128xf32>
    %cst_75 = arith.constant 0.000000e+00 : f32
    %268 = vector.broadcast %cst_75 : f32 to vector<12x128xf32>
    %269 = arith.maximumf %267, %268 : vector<12x128xf32>
    %cst_76 = arith.constant dense<0.000000e+00> : vector<12x128xf32>
    %270 = tpu.matmul %269, %237, %cst_76 {dimension_numbers = #tpu.dot_dimension_numbers<[1], [0], [0], [1], [0, 0, 1, 1], [], []>} : vector<12x128xf32>, vector<128x128xf32>, vector<12x128xf32> -> vector<12x128xf32>
    %271 = vector.broadcast %242 : vector<1x128xf32> to vector<12x128xf32>
    %272 = arith.addf %270, %271 : vector<12x128xf32>
    %cst_77 = arith.constant dense<0xFF800000> : vector<12xf32>
    %273 = vector.multi_reduction <maximumf>, %272, %cst_77 [1] : vector<12x128xf32> to vector<12xf32>
    %274 = vector.shape_cast %273 : vector<12xf32> to vector<12x1xf32>
    %275 = vector.broadcast %274 : vector<12x1xf32> to vector<12x128xf32>
    %276 = arith.subf %272, %275 : vector<12x128xf32>
    %277 = math.exp %276 : vector<12x128xf32>
    %cst_78 = arith.constant dense<0.000000e+00> : vector<12xf32>
    %278 = vector.multi_reduction <add>, %277, %cst_78 [1] : vector<12x128xf32> to vector<12xf32>
    %279 = vector.shape_cast %278 : vector<12xf32> to vector<12x1xf32>
    %280 = math.log %279 : vector<12x1xf32>
    %281 = arith.addf %274, %280 : vector<12x1xf32>
    %282 = vector.broadcast %281 : vector<12x1xf32> to vector<12x128xf32>
    %283 = arith.subf %272, %282 : vector<12x128xf32>
    %c0_79 = arith.constant 0 : index
    %c0_80 = arith.constant 0 : index
    %284 = vector.load %arg6[%c0_79, %c0_80] : memref<12x128xf32, #tpu.memory_space<vmem>>, vector<12x128xf32>
    tpu.vector_store %arg6[%c0_79, %c0_80], %283 {strides = array<i32>} : memref<12x128xf32, #tpu.memory_space<vmem>>, vector<12x128xf32>,
    return
  }
}

</mosaic_0001>

<llo_original>
// kernel: deit_forward.1
$region0: #{deit_forward.1}
  #allocation0 [shape = 'u32[]', space=smem, size = 0x4, offset = 0x4, fixed_abs, tag = 'smem constant byte address 0x4 - core index']
  #allocation1 [shape = 'u32[144,128]{1,0:T(1,128)}', space=vmem, size = 0x12000, scoped, tag = 'internal scratch']
  %s0 = inlined_call_operand.vmem [shape: f32[12,192], index: 0, kind: input, shape index: {}]
  %s1 = inlined_call_operand.vmem [shape: f32[460,32], index: 1, kind: input, shape index: {}]
  %s2 = inlined_call_operand.vmem [shape: f32[48,48], index: 2, kind: input, shape index: {}]
  %s3 = inlined_call_operand.vmem [shape: f32[2,32,256], index: 3, kind: input, shape index: {}]
  %s4 = inlined_call_operand.vmem [shape: f32[2,8,128], index: 4, kind: input, shape index: {}]
  %s5 = inlined_call_operand.vmem [shape: f32[164,128], index: 5, kind: input, shape index: {}]
  %s6 = inlined_call_operand.vmem [shape: f32[12,128], index: 6, kind: output, shape index: {}]
  %s7 = sld [smem:[#allocation0]]
  $region34: #{deit_forward.1} parent=0
    _
  %s9 = ssub.s32 1, %s7
  %s10 = scalar_select 0, %s9, %s7
  // Predicated region
  $region2: #{deit_forward.1} parent=0 // pred_check
    _
  $region3: #{deit_forward.1} parent=0 // pred_check_branch
    %12 = sbr.rel (0) target = $region5
  $region4: #{deit_forward.1} parent=0 // pred_region
    _
  $region5: #{deit_forward.1} parent=0 // pred_fallthru
    _
  // Predicated region
  $region6: #{deit_forward.1} parent=0 // pred_check
    _
  $region7: #{deit_forward.1} parent=0 // pred_check_branch
    %14 = sbr.rel (0) target = $region9
  $region8: #{deit_forward.1} parent=0 // pred_region
    _
  $region9: #{deit_forward.1} parent=0 // pred_fallthru
    _
  // Predicated region
  $region10: #{deit_forward.1} parent=0 // pred_check
    _
  $region11: #{deit_forward.1} parent=0 // pred_check_branch
    %16 = sbr.rel (0) target = $region13
  $region12: #{deit_forward.1} parent=0 // pred_region
    _
  $region13: #{deit_forward.1} parent=0 // pred_fallthru
    _
  // Predicated region
  $region14: #{deit_forward.1} parent=0 // pred_check
    _
  $region15: #{deit_forward.1} parent=0 // pred_check_branch
    %18 = sbr.rel (0) target = $region17
  $region16: #{deit_forward.1} parent=0 // pred_region
    _
  $region17: #{deit_forward.1} parent=0 // pred_fallthru
    _
  // Predicated region
  $region18: #{deit_forward.1} parent=0 // pred_check
    _
  $region19: #{deit_forward.1} parent=0 // pred_check_branch
    %20 = sbr.rel (0) target = $region21
  $region20: #{deit_forward.1} parent=0 // pred_region
    _
  $region21: #{deit_forward.1} parent=0 // pred_fallthru
    _
  // Predicated region
  $region22: #{deit_forward.1} parent=0 // pred_check
    _
  $region23: #{deit_forward.1} parent=0 // pred_check_branch
    %22 = sbr.rel (0) target = $region25
  $region24: #{deit_forward.1} parent=0 // pred_region
    _
  $region25: #{deit_forward.1} parent=0 // pred_fallthru
    _
  %v23 = vld [vmem:[%s1] sm:$0xff]
  %v24 = vld [vmem:[%s1 + $0x8] sm:$0xff]
  %v25 = vld [vmem:[%s1 + $0x10] sm:$0xff]
  %v26 = vld [vmem:[%s1 + $0x18] sm:$0xff]
  %v27 = vld [vmem:[%s1 + $0x20] sm:$0xff]
  %v28 = vld [vmem:[%s1 + $0x28] sm:$0xff]
  %v29 = vld [vmem:[%s1 + $0x30] sm:$0xff]
  %v30 = vld [vmem:[%s1 + $0x38] sm:$0xff]
  %v31 = vld [vmem:[%s1 + $0x40] sm:$0xff]
  %v32 = vld [vmem:[%s1 + $0x48] sm:$0xff]
  %v33 = vld [vmem:[%s1 + $0x50] sm:$0xff]
  %v34 = vld [vmem:[%s1 + $0x58] sm:$0xff]
  %v35 = vld [vmem:[%s1 + $0x60] sm:$0xff]
  %v36 = vld [vmem:[%s1 + $0x68] sm:$0xff]
  %v37 = vld [vmem:[%s1 + $0x70] sm:$0xff]
  %v38 = vld [vmem:[%s1 + $0x78] sm:$0xff]
  %v39 = vld [vmem:[%s1 + $0x80] sm:$0xff]
  %v40 = vld [vmem:[%s1 + $0x88] sm:$0xff]
  %v41 = vld [vmem:[%s1 + $0x90] sm:$0xff]
  %v42 = vld [vmem:[%s1 + $0x98] sm:$0xff]
  %v43 = vld [vmem:[%s1 + $0xa0] sm:$0xff]
  %v44 = vld [vmem:[%s1 + $0xa8] sm:$0xff]
  %v45 = vld [vmem:[%s1 + $0xb0] sm:$0xff]
  %v46 = vld [vmem:[%s1 + $0xb8] sm:$0xff]
  %v47 = vld [vmem:[%s1 + $0x1c0] sm:$0xff]
  %v48 = vld [vmem:[%s1 + $0x1c8] sm:$0xf]
  %v49 = vld [vmem:[%s0] sm:$0xff]
  %v50 = vld [vmem:[%s0 + $0x8] sm:$0xff]
  %v51 = vld [vmem:[%s0 + $0x10] sm:$0xf]
  %v52 = vld [vmem:[%s0 + $0x18] sm:$0xf]
  %vm53 = vcmask 523264
  %v55 = vsel %vm53, %v50, 0
  %v58 = vsel %vm53, %v52, 0
  %60 = vmatprep.subr.mxu0 0.0
  %61 = vmatpush1.msra.mxu0 %v23
  %62 = vmatprep.subr.mxu0 0.0
  %63 = vmatpush1.msra.mxu0 %v24
  %64 = vmatprep.subr.mxu0 0.0
  %65 = vmatpush1.msra.mxu0 %v25
  %66 = vmatprep.subr.mxu0 0.0
  %67 = vmatpush1.msra.mxu0 %v26
  %68 = vmatprep.subr.mxu0 0.0
  %69 = vmatpush1.msra.mxu0 %v27
  %70 = vmatprep.subr.mxu0 0.0
  %71 = vmatpush1.msra.mxu0 %v28
  %72 = vmatprep.subr.mxu0 0.0
  %73 = vmatpush1.msra.mxu0 %v29
  %74 = vmatprep.subr.mxu0 0.0
  %75 = vmatpush1.msra.mxu0 %v30
  %76 = vmatprep.subr.mxu0 0.0
  %77 = vmatpush1.msra.mxu0 %v31
  %78 = vmatprep.subr.mxu0 0.0
  %79 = vmatpush1.msra.mxu0 %v32
  %80 = vmatprep.subr.mxu0 0.0
  %81 = vmatpush1.msra.mxu0 %v33
  %82 = vmatprep.subr.mxu0 0.0
  %83 = vmatpush1.msra.mxu0 %v34
  %84 = vmatprep.subr.mxu0 0.0
  %85 = vmatpush1.msra.mxu0 %v35
  %86 = vmatprep.subr.mxu0 0.0
  %87 = vmatpush1.msra.mxu0 %v36
  %88 = vmatprep.subr.mxu0 0.0
  %89 = vmatpush1.msra.mxu0 %v37
  %90 = vmatprep.subr.mxu0 0.0
  %91 = vmatpush1.msra.mxu0 %v38
  %92 = vmatprep.subr.mxu0 0.0
  %93 = vmatpush1.msra.mxu0 %v39
  %94 = vmatprep.subr.mxu0 0.0
  %95 = vmatpush1.msra.mxu0 %v40
  %96 = vmatprep.subr.mxu0 0.0
  %97 = vmatpush1.msra.mxu0 %v41
  %98 = vmatprep.subr.mxu0 0.0
  %99 = vmatpush1.msra.mxu0 %v42
  %100 = vmatprep.subr.mxu0 0.0
  %101 = vmatpush1.msra.mxu0 %v43
  %102 = vmatprep.subr.mxu0 0.0
  %103 = vmatpush1.msra.mxu0 %v44
  %104 = vmatprep.subr.mxu0 0.0
  %105 = vmatpush1.msra.mxu0 %v45
  %106 = vmatprep.subr.mxu0 0.0
  %107 = vmatpush1.msra.mxu0 %v46
  %108 = vmatprep.subr.mxu0 0.0
  %109 = vmatpush1.msra.mxu0 0.0
  %110 = vmatprep.subr.mxu0 0.0
  %111 = vmatpush1.msra.mxu0 0.0
  %112 = vmatprep.subr.mxu0 0.0
  %113 = vmatpush1.msra.mxu0 0.0
  %114 = vmatprep.subr.mxu0 0.0
  %115 = vmatpush1.msra.mxu0 0.0
  %116 = vmatprep.subr.mxu0 0.0
  %117 = vmatpush1.msra.mxu0 0.0
  %118 = vmatprep.subr.mxu0 0.0
  %119 = vmatpush1.msra.mxu0 0.0
  %120 = vmatprep.subr.mxu0 0.0
  %121 = vmatpush1.msra.mxu0 0.0
  %122 = vmatprep.subr.mxu0 0.0
  %123 = vmatpush1.msra.mxu0 0.0
  %124 = vmatprep.mubr.f32.mxu0 %v55
  %125 = vmatmul.mubr.f32.gmra.mrb[0].mxu0 %v49
  %v126 = vpop.f32.mrb[0].mxu0
  %v127 = vadd.f32 %v47, %v126
  %v128 = vpop.f32.mrb[0].mxu0
  %129 = vmatprep.mubr.f32.mxu0 %v58
  %130 = vmatmul.mubr.f32.gmra.mrb[0].mxu0 %v51
  %v131 = vpop.f32.mrb[0].mxu0
  %v132 = vadd.f32 %v48, %v131
  %v133 = vpop.f32.mrb[0].mxu0
  %134 = vdwg.mxu0
  %v135 = vld [vmem:[%s2] sm:$0xff]
  %v136 = vld [vmem:[%s2 + $0x8] sm:$0xff]
  %v137 = vld [vmem:[%s2 + $0x10] sm:$0xff]
  %v138 = vld [vmem:[%s2 + $0x18] sm:$0xff]
  %v139 = vld [vmem:[%s2 + $0x20] sm:$0xff]
  %v140 = vld [vmem:[%s2 + $0x28] sm:$0xff]
  %v141 = vld [vmem:[%s3] sm:$0xff]
  %v142 = vld [vmem:[%s3 + $0x8] sm:$0xff]
  %v143 = vld [vmem:[%s3 + $0x10] sm:$0xff]
  %v144 = vld [vmem:[%s3 + $0x18] sm:$0xff]
  %v145 = vld [vmem:[%s3 + $0x20] sm:$0xff]
  %v146 = vld [vmem:[%s3 + $0x28] sm:$0xff]
  %v147 = vld [vmem:[%s3 + $0x30] sm:$0xff]
  %v148 = vld [vmem:[%s3 + $0x38] sm:$0xff]
  %v149 = vld [vmem:[%s4] sm:$0xff]
  %v150 = vld [vmem:[%s1 + $0xc0] sm:$0xff]
  %v151 = vld [vmem:[%s1 + $0xc8] sm:$0xff]
  %v152 = vld [vmem:[%s1 + $0xd0] sm:$0xff]
  %v153 = vld [vmem:[%s1 + $0xd8] sm:$0xff]
  %v154 = vld [vmem:[%s1 + $0xe0] sm:$0xff]
  %v155 = vld [vmem:[%s1 + $0xe8] sm:$0xff]
  %v156 = vld [vmem:[%s1 + $0xf0] sm:$0xff]
  %v157 = vld [vmem:[%s1 + $0xf8] sm:$0xff]
  %v158 = vld [vmem:[%s1 + $0x100] sm:$0xff]
  %v159 = vld [vmem:[%s1 + $0x108] sm:$0xff]
  %v160 = vld [vmem:[%s1 + $0x110] sm:$0xff]
  %v161 = vld [vmem:[%s1 + $0x118] sm:$0xff]
  %v162 = vld [vmem:[%s1 + $0x120] sm:$0xff]
  %v163 = vld [vmem:[%s1 + $0x128] sm:$0xff]
  %v164 = vld [vmem:[%s1 + $0x130] sm:$0xff]
  %v165 = vld [vmem:[%s1 + $0x138] sm:$0xff]
  %vm166 = vcmask 261120
  %v167 = vsel %vm166, %v127, 0.0
  %168 = vadd.xlane.f32.xlu0 %v167
  %v169 = vpop.xlane.xlu0 %168
  %vm170 = vcmask 257024
  %v171 = vsel %vm170, %v132, 0.0
  %172 = vadd.xlane.f32.xlu0 %v171
  %v173 = vpop.xlane.xlu0 %172
  %v174 = vrcp.pop 32.0
  %v175 = vmul.f32 %v169, %v174
  %v176 = vmul.f32 %v173, %v174
  %v177 = vsub.f32 %v127, %v175
  %v178 = vsub.f32 %v132, %v176
  %v179 = vmul.f32 %v177, %v177
  %v180 = vmul.f32 %v178, %v178
  %v181 = vsel %vm166, %v179, 0.0
  %182 = vadd.xlane.f32.xlu0 %v181
  %v183 = vpop.xlane.xlu0 %182
  %v184 = vsel %vm170, %v180, 0.0
  %185 = vadd.xlane.f32.xlu0 %v184
  %v186 = vpop.xlane.xlu0 %185
  %v187 = vmul.f32 %v183, %v174
  %v188 = vmul.f32 %v186, %v174
  %v189 = vadd.f32 %v187, 1e-12
  %v190 = vadd.f32 %v188, 1e-12
  %v191 = vrsqrt.pop %v189
  %v192 = vrsqrt.pop %v190
  %v193 = vmul.f32 %v177, %v191
  %v194 = vmul.f32 %v178, %v192
  %v195 = vlaneseq
  %v196 = vshrl.u32 %v195, 7
  %v197 = vsub.s32 0, %v196
  %v198 = vrot.slane %v149, %v197
  %v199 = vmul.f32 %v193, %v198
  %v200 = vmul.f32 %v194, %v198
  %v201 = vlaneseq
  %v202 = vshrl.u32 %v201, 7
  %v203 = vsub.s32 1, %v202
  %v204 = vrot.slane %v149, %v203
  %v205 = vadd.f32 %v199, %v204
  %v206 = vadd.f32 %v200, %v204
  %v207 = vlaneseq
  %v208 = vshrl.u32 %v207, 7
  %v209 = vsub.s32 2, %v208
  %v210 = vrot.slane %v149, %v209
  %v212 = vsel %vm166, %v205, 0
  %v215 = vsel %vm166, %v206, 0
  %217 = vmatprep.subr.mxu0 0.0
  %218 = vmatpush1.msra.mxu0 %v141
  %219 = vmatprep.subr.mxu0 0.0
  %220 = vmatpush1.msra.mxu0 %v143
  %221 = vmatprep.subr.mxu0 0.0
  %222 = vmatpush1.msra.mxu0 %v145
  %223 = vmatprep.subr.mxu0 0.0
  %224 = vmatpush1.msra.mxu0 %v147
  %225 = vmatprep.subr.mxu0 0.0
  %226 = vmatpush1.msra.mxu0 0.0
  %227 = vmatprep.subr.mxu0 0.0
  %228 = vmatpush1.msra.mxu0 0.0
  %229 = vmatprep.subr.mxu0 0.0
  %230 = vmatpush1.msra.mxu0 0.0
  %231 = vmatprep.subr.mxu0 0.0
  %232 = vmatpush1.msra.mxu0 0.0
  %233 = vmatprep.subr.mxu0 0.0
  %234 = vmatpush1.msra.mxu0 0.0
  %235 = vmatprep.subr.mxu0 0.0
  %236 = vmatpush1.msra.mxu0 0.0
  %237 = vmatprep.subr.mxu0 0.0
  %238 = vmatpush1.msra.mxu0 0.0
  %239 = vmatprep.subr.mxu0 0.0
  %240 = vmatpush1.msra.mxu0 0.0
  %241 = vmatprep.subr.mxu0 0.0
  %242 = vmatpush1.msra.mxu0 0.0
  %243 = vmatprep.subr.mxu0 0.0
  %244 = vmatpush1.msra.mxu0 0.0
  %245 = vmatprep.subr.mxu0 0.0
  %246 = vmatpush1.msra.mxu0 0.0
  %247 = vmatprep.subr.mxu0 0.0
  %248 = vmatpush1.msra.mxu0 0.0
  %249 = vmatprep.subr.mxu0 0.0
  %250 = vmatpush1.msra.mxu0 0.0
  %251 = vmatprep.subr.mxu0 0.0
  %252 = vmatpush1.msra.mxu0 0.0
  %253 = vmatprep.subr.mxu0 0.0
  %254 = vmatpush1.msra.mxu0 0.0
  %255 = vmatprep.subr.mxu0 0.0
  %256 = vmatpush1.msra.mxu0 0.0
  %257 = vmatprep.subr.mxu0 0.0
  %258 = vmatpush1.msra.mxu0 0.0
  %259 = vmatprep.subr.mxu0 0.0
  %260 = vmatpush1.msra.mxu0 0.0
  %261 = vmatprep.subr.mxu0 0.0
  %262 = vmatpush1.msra.mxu0 0.0
  %263 = vmatprep.subr.mxu0 0.0
  %264 = vmatpush1.msra.mxu0 0.0
  %265 = vmatprep.subr.mxu0 0.0
  %266 = vmatpush1.msra.mxu0 0.0
  %267 = vmatprep.subr.mxu0 0.0
  %268 = vmatpush1.msra.mxu0 0.0
  %269 = vmatprep.subr.mxu0 0.0
  %270 = vmatpush1.msra.mxu0 0.0
  %271 = vmatprep.subr.mxu0 0.0
  %272 = vmatpush1.msra.mxu0 0.0
  %273 = vmatprep.subr.mxu0 0.0
  %274 = vmatpush1.msra.mxu0 0.0
  %275 = vmatprep.subr.mxu0 0.0
  %276 = vmatpush1.msra.mxu0 0.0
  %277 = vmatprep.subr.mxu0 0.0
  %278 = vmatpush1.msra.mxu0 0.0
  %279 = vmatprep.subr.mxu0 0.0
  %280 = vmatpush1.msra.mxu0 0.0
  %281 = vmatprep.mubr.f32.mxu0 0.0
  %282 = vmatmul.mubr.f32.gmra.mrb[0].mxu0 %v212
  %v283 = vpop.f32.mrb[0].mxu0
  %v284 = vadd.f32 %v210, %v283
  %v285 = vpop.f32.mrb[0].mxu0
  %286 = vmatprep.mubr.f32.mxu0 0.0
  %287 = vmatmul.mubr.f32.gmra.mrb[0].mxu0 %v215
  %v288 = vpop.f32.mrb[0].mxu0
  %v289 = vadd.f32 %v210, %v288
  %v290 = vpop.f32.mrb[0].mxu0
  %291 = vdwg.mxu0
  %vm294 = vcmask 1043456
  %v295 = vrot.slane %v284, 4
  %v296 = vrot.slane %v289, 4
  %v297 = vsel %vm294, %v295, %v296
  %298 = vrot.lane.b32.xlu0 %v295, 104
  %v299 = vpop.permute.xlu0 %298
  %300 = vrot.lane.b32.xlu0 %v297, 104
  %v301 = vpop.permute.xlu0 %300
  %303 = vrot.lane.b32.xlu0 %v284, 80
  %v304 = vpop.permute.xlu0 %303
  %305 = vrot.lane.b32.xlu0 %v289, 80
  %v306 = vpop.permute.xlu0 %305
  %308 = vrot.lane.b32.xlu0 %v295, 56
  %v309 = vpop.permute.xlu0 %308
  %310 = vrot.lane.b32.xlu0 %v297, 56
  %v311 = vpop.permute.xlu0 %310
  %v313 = vsel %vm294, %v289, %v299
  %v314 = vsel %vm294, %v306, %v309
  %317 = vrot.lane.b32.xlu0 %v284, 120
  %v318 = vpop.permute.xlu0 %317
  %319 = vrot.lane.b32.xlu0 %v313, 120
  %v320 = vpop.permute.xlu0 %319
  %321 = vrot.lane.b32.xlu0 %v301, 120
  %v322 = vpop.permute.xlu0 %321
  %323 = vrot.lane.b32.xlu0 %v304, 120
  %v324 = vpop.permute.xlu0 %323
  %325 = vrot.lane.b32.xlu0 %v314, 120
  %v326 = vpop.permute.xlu0 %325
  %327 = vrot.lane.b32.xlu0 %v311, 120
  %v328 = vpop.permute.xlu0 %327
  %vm329 = vcmask 64512
  %v330 = vsel %vm329, %v284, 0
  %v332 = vsel %vm329, %v313, 0
  %v334 = vsel %vm329, %v301, 0
  %v336 = vsel %vm329, %v304, 0
  %v338 = vsel %vm329, %v314, 0
  %v340 = vsel %vm329, %v311, 0
  %v342 = vsel %vm329, %v318, 0
  %v344 = vsel %vm329, %v320, 0
  %v346 = vsel %vm329, %v322, 0
  %v348 = vsel %vm329, %v324, 0
  %v350 = vsel %vm329, %v326, 0
  %v352 = vsel %vm329, %v328, 0
  %354 = vmatprep.subr.mxu0 0.0
  %355 = vmatpush1.xpose.msra.mxu0 %v342
  %356 = vmatprep.subr.mxu0 0.0
  %357 = vmatpush1.xpose.msra.mxu0 %v344
  %358 = vmatprep.subr.mxu0 0.0
  %359 = vmatpush1.xpose.msra.mxu0 %v346
  %360 = vmatprep.subr.mxu0 0.0
  %361 = vmatpush1.xpose.msra.mxu0 %v348
  %362 = vmatprep.subr.mxu0 0.0
  %363 = vmatpush1.xpose.msra.mxu0 %v350
  %364 = vmatprep.subr.mxu0 0.0
  %365 = vmatpush1.xpose.msra.mxu0 %v352
  %366 = vmatprep.subr.mxu0 0.0
  %367 = vmatpush1.xpose.msra.mxu0 0.0
  %368 = vmatprep.subr.mxu0 0.0
  %369 = vmatpush1.xpose.msra.mxu0 0.0
  %370 = vmatprep.subr.mxu0 0.0
  %371 = vmatpush1.xpose.msra.mxu0 0.0
  %372 = vmatprep.subr.mxu0 0.0
  %373 = vmatpush1.xpose.msra.mxu0 0.0
  %374 = vmatprep.subr.mxu0 0.0
  %375 = vmatpush1.xpose.msra.mxu0 0.0
  %376 = vmatprep.subr.mxu0 0.0
  %377 = vmatpush1.xpose.msra.mxu0 0.0
  %378 = vmatprep.subr.mxu0 0.0
  %379 = vmatpush1.xpose.msra.mxu0 0.0
  %380 = vmatprep.subr.mxu0 0.0
  %381 = vmatpush1.xpose.msra.mxu0 0.0
  %382 = vmatprep.subr.mxu0 0.0
  %383 = vmatpush1.xpose.msra.mxu0 0.0
  %384 = vmatprep.subr.mxu0 0.0
  %385 = vmatpush1.xpose.msra.mxu0 0.0
  %386 = vmatprep.subr.mxu0 0.0
  %387 = vmatpush1.xpose.msra.mxu0 0.0
  %388 = vmatprep.subr.mxu0 0.0
  %389 = vmatpush1.xpose.msra.mxu0 0.0
  %390 = vmatprep.subr.mxu0 0.0
  %391 = vmatpush1.xpose.msra.mxu0 0.0
  %392 = vmatprep.subr.mxu0 0.0
  %393 = vmatpush1.xpose.msra.mxu0 0.0
  %394 = vmatprep.subr.mxu0 0.0
  %395 = vmatpush1.xpose.msra.mxu0 0.0
  %396 = vmatprep.subr.mxu0 0.0
  %397 = vmatpush1.xpose.msra.mxu0 0.0
  %398 = vmatprep.subr.mxu0 0.0
  %399 = vmatpush1.xpose.msra.mxu0 0.0
  %400 = vmatprep.subr.mxu0 0.0
  %401 = vmatpush1.xpose.msra.mxu0 0.0
  %402 = vmatprep.subr.mxu0 0.0
  %403 = vmatpush1.xpose.msra.mxu0 0.0
  %404 = vmatprep.subr.mxu0 0.0
  %405 = vmatpush1.xpose.msra.mxu0 0.0
  %406 = vmatprep.subr.mxu0 0.0
  %407 = vmatpush1.xpose.msra.mxu0 0.0
  %408 = vmatprep.subr.mxu0 0.0
  %409 = vmatpush1.xpose.msra.mxu0 0.0
  %410 = vmatprep.subr.mxu0 0.0
  %411 = vmatpush1.xpose.msra.mxu0 0.0
  %412 = vmatprep.subr.mxu0 0.0
  %413 = vmatpush1.xpose.msra.mxu0 0.0
  %414 = vmatprep.subr.mxu0 0.0
  %415 = vmatpush1.xpose.msra.mxu0 0.0
  %416 = vmatprep.subr.mxu0 0.0
  %417 = vmatpush1.xpose.msra.mxu0 0.0
  %418 = vmatprep.mubr.f32.mxu0 0.0
  %419 = vmatmul.mubr.f32.gmra.mrb[0].mxu0 %v330
  %v420 = vpop.f32.mrb[0].mxu0
  %v421 = vadd.f32 0.0, %v420
  %v422 = vpop.f32.mrb[0].mxu0
  %423 = vmatprep.mubr.f32.mxu0 0.0
  %424 = vmatmul.mubr.f32.gmra.mrb[0].mxu0 %v332
  %v425 = vpop.f32.mrb[0].mxu0
  %v426 = vadd.f32 0.0, %v425
  %v427 = vpop.f32.mrb[0].mxu0
  %428 = vmatprep.mubr.f32.mxu0 0.0
  %429 = vmatmul.mubr.f32.gmra.mrb[0].mxu0 %v334
  %v430 = vpop.f32.mrb[0].mxu0
  %v431 = vadd.f32 0.0, %v430
  %v432 = vpop.f32.mrb[0].mxu0
  %433 = vmatprep.mubr.f32.mxu0 0.0
  %434 = vmatmul.mubr.f32.gmra.mrb[0].mxu0 %v336
  %v435 = vpop.f32.mrb[0].mxu0
  %v436 = vadd.f32 0.0, %v435
  %v437 = vpop.f32.mrb[0].mxu0
  %438 = vmatprep.mubr.f32.mxu0 0.0
  %439 = vmatmul.mubr.f32.gmra.mrb[0].mxu0 %v338
  %v440 = vpop.f32.mrb[0].mxu0
  %v441 = vadd.f32 0.0, %v440
  %v442 = vpop.f32.mrb[0].mxu0
  %443 = vmatprep.mubr.f32.mxu0 0.0
  %444 = vmatmul.mubr.f32.gmra.mrb[0].mxu0 %v340
  %v445 = vpop.f32.mrb[0].mxu0
  %v446 = vadd.f32 0.0, %v445
  %v447 = vpop.f32.mrb[0].mxu0
  %448 = vdwg.mxu0
  %v449 = vmul.f32 %v421, 0.35355338
  %v450 = vmul.f32 %v426, 0.35355338
  %v451 = vmul.f32 %v431, 0.35355338
  %v452 = vmul.f32 %v436, 0.35355338
  %v453 = vmul.f32 %v441, 0.35355338
  %v454 = vmul.f32 %v446, 0.35355338
  %v455 = vadd.f32 %v449, %v135
  %v456 = vadd.f32 %v450, %v136
  %v457 = vadd.f32 %v451, %v137
  %v458 = vadd.f32 %v452, %v138
  %v459 = vadd.f32 %v453, %v139
  %v460 = vadd.f32 %v454, %v140
  %vm461 = vcmask 392192
  %v462 = vsel %vm461, %v455, -inf
  %463 = vmax.xlane.f32.xlu0 %v462
  %v464 = vpop.xlane.xlu0 %463
  %v465 = vsel %vm461, %v456, -inf
  %466 = vmax.xlane.f32.xlu0 %v465
  %v467 = vpop.xlane.xlu0 %466
  %v468 = vsel %vm461, %v457, -inf
  %469 = vmax.xlane.f32.xlu0 %v468
  %v470 = vpop.xlane.xlu0 %469
  %v471 = vsel %vm461, %v458, -inf
  %472 = vmax.xlane.f32.xlu0 %v471
  %v473 = vpop.xlane.xlu0 %472
  %v474 = vsel %vm461, %v459, -inf
  %475 = vmax.xlane.f32.xlu0 %v474
  %v476 = vpop.xlane.xlu0 %475
  %v477 = vsel %vm461, %v460, -inf
  %478 = vmax.xlane.f32.xlu0 %v477
  %v479 = vpop.xlane.xlu0 %478
  %v480 = vsub.f32 %v455, %v464
  %v481 = vsub.f32 %v456, %v467
  %v482 = vsub.f32 %v457, %v470
  %v483 = vsub.f32 %v458, %v473
  %v484 = vsub.f32 %v459, %v476
  %v485 = vsub.f32 %v460, %v479
  %v486 = vmul.f32 %v480, 1.442695
  %v487 = vpow.pop %v486
  %v488 = vmul.f32 %v481, 1.442695
  %v489 = vpow.pop %v488
  %v490 = vmul.f32 %v482, 1.442695
  %v491 = vpow.pop %v490
  %v492 = vmul.f32 %v483, 1.442695
  %v493 = vpow.pop %v492
  %v494 = vmul.f32 %v484, 1.442695
  %v495 = vpow.pop %v494
  %v496 = vmul.f32 %v485, 1.442695
  %v497 = vpow.pop %v496
  %v498 = vsel %vm461, %v487, 0.0
  %499 = vadd.xlane.f32.xlu0 %v498
  %v500 = vpop.xlane.xlu0 %499
  %v501 = vsel %vm461, %v489, 0.0
  %502 = vadd.xlane.f32.xlu0 %v501
  %v503 = vpop.xlane.xlu0 %502
  %v504 = vsel %vm461, %v491, 0.0
  %505 = vadd.xlane.f32.xlu0 %v504
  %v506 = vpop.xlane.xlu0 %505
  %v507 = vsel %vm461, %v493, 0.0
  %508 = vadd.xlane.f32.xlu0 %v507
  %v509 = vpop.xlane.xlu0 %508
  %v510 = vsel %vm461, %v495, 0.0
  %511 = vadd.xlane.f32.xlu0 %v510
  %v512 = vpop.xlane.xlu0 %511
  %v513 = vsel %vm461, %v497, 0.0
  %514 = vadd.xlane.f32.xlu0 %v513
  %v515 = vpop.xlane.xlu0 %514
  %v516 = vrcp.pop %v500
  %v517 = vrcp.pop %v503
  %v518 = vrcp.pop %v506
  %v519 = vrcp.pop %v509
  %v520 = vrcp.pop %v512
  %v521 = vrcp.pop %v515
  %v522 = vmul.f32 %v487, %v516
  %v523 = vmul.f32 %v489, %v517
  %v524 = vmul.f32 %v491, %v518
  %v525 = vmul.f32 %v493, %v519
  %v526 = vmul.f32 %v495, %v520
  %v527 = vmul.f32 %v497, %v521
  %528 = vrot.lane.b32.xlu0 %v284, 112
  %v529 = vpop.permute.xlu0 %528
  %530 = vrot.lane.b32.xlu0 %v313, 112
  %v531 = vpop.permute.xlu0 %530
  %532 = vrot.lane.b32.xlu0 %v301, 112
  %v533 = vpop.permute.xlu0 %532
  %534 = vrot.lane.b32.xlu0 %v304, 112
  %v535 = vpop.permute.xlu0 %534
  %536 = vrot.lane.b32.xlu0 %v314, 112
  %v537 = vpop.permute.xlu0 %536
  %538 = vrot.lane.b32.xlu0 %v311, 112
  %v539 = vpop.permute.xlu0 %538
  %v547 = vsel %vm461, %v522, 0
  %v550 = vsel %vm461, %v523, 0
  %v553 = vsel %vm461, %v524, 0
  %v556 = vsel %vm461, %v525, 0
  %v559 = vsel %vm461, %v526, 0
  %v562 = vsel %vm461, %v527, 0
  %564 = vmatprep.subr.mxu0 0.0
  %565 = vmatpush1.msra.mxu0 %v529
  %566 = vmatprep.subr.mxu0 0.0
  %567 = vmatpush1.msra.mxu0 %v531
  %568 = vmatprep.subr.mxu0 0.0
  %569 = vmatpush1.msra.mxu0 %v533
  %570 = vmatprep.subr.mxu0 0.0
  %571 = vmatpush1.msra.mxu0 %v535
  %572 = vmatprep.subr.mxu0 0.0
  %573 = vmatpush1.msra.mxu0 %v537
  %574 = vmatprep.subr.mxu0 0.0
  %575 = vmatpush1.msra.mxu0 %v539
  %576 = vmatprep.subr.mxu0 0.0
  %577 = vmatpush1.msra.mxu0 0.0
  %578 = vmatprep.subr.mxu0 0.0
  %579 = vmatpush1.msra.mxu0 0.0
  %580 = vmatprep.subr.mxu0 0.0
  %581 = vmatpush1.msra.mxu0 0.0
  %582 = vmatprep.subr.mxu0 0.0
  %583 = vmatpush1.msra.mxu0 0.0
  %584 = vmatprep.subr.mxu0 0.0
  %585 = vmatpush1.msra.mxu0 0.0
  %586 = vmatprep.subr.mxu0 0.0
  %587 = vmatpush1.msra.mxu0 0.0
  %588 = vmatprep.subr.mxu0 0.0
  %589 = vmatpush1.msra.mxu0 0.0
  %590 = vmatprep.subr.mxu0 0.0
  %591 = vmatpush1.msra.mxu0 0.0
  %592 = vmatprep.subr.mxu0 0.0
  %593 = vmatpush1.msra.mxu0 0.0
  %594 = vmatprep.subr.mxu0 0.0
  %595 = vmatpush1.msra.mxu0 0.0
  %596 = vmatprep.subr.mxu0 0.0
  %597 = vmatpush1.msra.mxu0 0.0
  %598 = vmatprep.subr.mxu0 0.0
  %599 = vmatpush1.msra.mxu0 0.0
  %600 = vmatprep.subr.mxu0 0.0
  %601 = vmatpush1.msra.mxu0 0.0
  %602 = vmatprep.subr.mxu0 0.0
  %603 = vmatpush1.msra.mxu0 0.0
  %604 = vmatprep.subr.mxu0 0.0
  %605 = vmatpush1.msra.mxu0 0.0
  %606 = vmatprep.subr.mxu0 0.0
  %607 = vmatpush1.msra.mxu0 0.0
  %608 = vmatprep.subr.mxu0 0.0
  %609 = vmatpush1.msra.mxu0 0.0
  %610 = vmatprep.subr.mxu0 0.0
  %611 = vmatpush1.msra.mxu0 0.0
  %612 = vmatprep.subr.mxu0 0.0
  %613 = vmatpush1.msra.mxu0 0.0
  %614 = vmatprep.subr.mxu0 0.0
  %615 = vmatpush1.msra.mxu0 0.0
  %616 = vmatprep.subr.mxu0 0.0
  %617 = vmatpush1.msra.mxu0 0.0
  %618 = vmatprep.subr.mxu0 0.0
  %619 = vmatpush1.msra.mxu0 0.0
  %620 = vmatprep.subr.mxu0 0.0
  %621 = vmatpush1.msra.mxu0 0.0
  %622 = vmatprep.subr.mxu0 0.0
  %623 = vmatpush1.msra.mxu0 0.0
  %624 = vmatprep.subr.mxu0 0.0
  %625 = vmatpush1.msra.mxu0 0.0
  %626 = vmatprep.subr.mxu0 0.0
  %627 = vmatpush1.msra.mxu0 0.0
  %628 = vmatprep.mubr.f32.mxu0 0.0
  %629 = vmatmul.mubr.f32.gmra.mrb[0].mxu0 %v547
  %v630 = vpop.f32.mrb[0].mxu0
  %v631 = vadd.f32 0.0, %v630
  %v632 = vpop.f32.mrb[0].mxu0
  %633 = vmatprep.mubr.f32.mxu0 0.0
  %634 = vmatmul.mubr.f32.gmra.mrb[0].mxu0 %v550
  %v635 = vpop.f32.mrb[0].mxu0
  %v636 = vadd.f32 0.0, %v635
  %v637 = vpop.f32.mrb[0].mxu0
  %638 = vmatprep.mubr.f32.mxu0 0.0
  %639 = vmatmul.mubr.f32.gmra.mrb[0].mxu0 %v553
  %v640 = vpop.f32.mrb[0].mxu0
  %v641 = vadd.f32 0.0, %v640
  %v642 = vpop.f32.mrb[0].mxu0
  %643 = vmatprep.mubr.f32.mxu0 0.0
  %644 = vmatmul.mubr.f32.gmra.mrb[0].mxu0 %v556
  %v645 = vpop.f32.mrb[0].mxu0
  %v646 = vadd.f32 0.0, %v645
  %v647 = vpop.f32.mrb[0].mxu0
  %648 = vmatprep.mubr.f32.mxu0 0.0
  %649 = vmatmul.mubr.f32.gmra.mrb[0].mxu0 %v559
  %v650 = vpop.f32.mrb[0].mxu0
  %v651 = vadd.f32 0.0, %v650
  %v652 = vpop.f32.mrb[0].mxu0
  %653 = vmatprep.mubr.f32.mxu0 0.0
  %654 = vmatmul.mubr.f32.gmra.mrb[0].mxu0 %v562
  %v655 = vpop.f32.mrb[0].mxu0
  %v656 = vadd.f32 0.0, %v655
  %v657 = vpop.f32.mrb[0].mxu0
  %658 = vdwg.mxu0
  %v661 = vrot.slane %v636, 4
  %v662 = vrot.slane %v641, 4
  %v663 = vsel %vm294, %v661, %v662
  %664 = vrot.lane.b32.xlu0 %v663, 8
  %v665 = vpop.permute.xlu0 %664
  %666 = vrot.lane.b32.xlu0 %v662, 8
  %v667 = vpop.permute.xlu0 %666
  %672 = vrot.lane.b32.xlu0 %v646, 16
  %v673 = vpop.permute.xlu0 %672
  %674 = vrot.lane.b32.xlu0 %v651, 16
  %v675 = vpop.permute.xlu0 %674
  %v679 = vrot.slane %v651, 4
  %v680 = vrot.slane %v656, 4
  %v681 = vsel %vm294, %v679, %v680
  %682 = vrot.lane.b32.xlu0 %v681, 24
  %v683 = vpop.permute.xlu0 %682
  %684 = vrot.lane.b32.xlu0 %v680, 24
  %v685 = vpop.permute.xlu0 %684
  %v688 = vsel %vm329, %v631, %v665
  %v689 = vsel %vm329, %v636, %v667
  %vm690 = vcmask 130048
  %v691 = vsel %vm690, %v688, %v673
  %v692 = vsel %vm690, %v689, %v675
  %vm693 = vcmask 195584
  %v694 = vsel %vm693, %v691, %v683
  %v695 = vsel %vm693, %v692, %v685
  %700 = vrot.lane.b32.xlu0 %v141, 32
  %v701 = vpop.permute.xlu0 %700
  %702 = vrot.lane.b32.xlu0 %v143, 32
  %v703 = vpop.permute.xlu0 %702
  %704 = vrot.lane.b32.xlu0 %v145, 32
  %v705 = vpop.permute.xlu0 %704
  %706 = vrot.lane.b32.xlu0 %v147, 32
  %v707 = vpop.permute.xlu0 %706
  %v713 = vsel %vm166, %v694, 0
  %v716 = vsel %vm166, %v695, 0
  %718 = vmatprep.subr.mxu0 0.0
  %719 = vmatpush1.msra.mxu0 %v701
  %720 = vmatprep.subr.mxu0 0.0
  %721 = vmatpush1.msra.mxu0 %v703
  %722 = vmatprep.subr.mxu0 0.0
  %723 = vmatpush1.msra.mxu0 %v705
  %724 = vmatprep.subr.mxu0 0.0
  %725 = vmatpush1.msra.mxu0 %v707
  %726 = vmatprep.subr.mxu0 0.0
  %727 = vmatpush1.msra.mxu0 0.0
  %728 = vmatprep.subr.mxu0 0.0
  %729 = vmatpush1.msra.mxu0 0.0
  %730 = vmatprep.subr.mxu0 0.0
  %731 = vmatpush1.msra.mxu0 0.0
  %732 = vmatprep.subr.mxu0 0.0
  %733 = vmatpush1.msra.mxu0 0.0
  %734 = vmatprep.subr.mxu0 0.0
  %735 = vmatpush1.msra.mxu0 0.0
  %736 = vmatprep.subr.mxu0 0.0
  %737 = vmatpush1.msra.mxu0 0.0
  %738 = vmatprep.subr.mxu0 0.0
  %739 = vmatpush1.msra.mxu0 0.0
  %740 = vmatprep.subr.mxu0 0.0
  %741 = vmatpush1.msra.mxu0 0.0
  %742 = vmatprep.subr.mxu0 0.0
  %743 = vmatpush1.msra.mxu0 0.0
  %744 = vmatprep.subr.mxu0 0.0
  %745 = vmatpush1.msra.mxu0 0.0
  %746 = vmatprep.subr.mxu0 0.0
  %747 = vmatpush1.msra.mxu0 0.0
  %748 = vmatprep.subr.mxu0 0.0
  %749 = vmatpush1.msra.mxu0 0.0
  %750 = vmatprep.subr.mxu0 0.0
  %751 = vmatpush1.msra.mxu0 0.0
  %752 = vmatprep.subr.mxu0 0.0
  %753 = vmatpush1.msra.mxu0 0.0
  %754 = vmatprep.subr.mxu0 0.0
  %755 = vmatpush1.msra.mxu0 0.0
  %756 = vmatprep.subr.mxu0 0.0
  %757 = vmatpush1.msra.mxu0 0.0
  %758 = vmatprep.subr.mxu0 0.0
  %759 = vmatpush1.msra.mxu0 0.0
  %760 = vmatprep.subr.mxu0 0.0
  %761 = vmatpush1.msra.mxu0 0.0
  %762 = vmatprep.subr.mxu0 0.0
  %763 = vmatpush1.msra.mxu0 0.0
  %764 = vmatprep.subr.mxu0 0.0
  %765 = vmatpush1.msra.mxu0 0.0
  %766 = vmatprep.subr.mxu0 0.0
  %767 = vmatpush1.msra.mxu0 0.0
  %768 = vmatprep.subr.mxu0 0.0
  %769 = vmatpush1.msra.mxu0 0.0
  %770 = vmatprep.subr.mxu0 0.0
  %771 = vmatpush1.msra.mxu0 0.0
  %772 = vmatprep.subr.mxu0 0.0
  %773 = vmatpush1.msra.mxu0 0.0
  %774 = vmatprep.subr.mxu0 0.0
  %775 = vmatpush1.msra.mxu0 0.0
  %776 = vmatprep.subr.mxu0 0.0
  %777 = vmatpush1.msra.mxu0 0.0
  %778 = vmatprep.subr.mxu0 0.0
  %779 = vmatpush1.msra.mxu0 0.0
  %780 = vmatprep.subr.mxu0 0.0
  %781 = vmatpush1.msra.mxu0 0.0
  %782 = vmatprep.mubr.f32.mxu0 0.0
  %783 = vmatmul.mubr.f32.gmra.mrb[0].mxu0 %v713
  %v784 = vpop.f32.mrb[0].mxu0
  %v785 = vadd.f32 0.0, %v784
  %v786 = vpop.f32.mrb[0].mxu0
  %787 = vmatprep.mubr.f32.mxu0 0.0
  %788 = vmatmul.mubr.f32.gmra.mrb[0].mxu0 %v716
  %v789 = vpop.f32.mrb[0].mxu0
  %v790 = vadd.f32 0.0, %v789
  %v791 = vpop.f32.mrb[0].mxu0
  %792 = vdwg.mxu0
  %v793 = vadd.f32 %v127, %v785
  %v794 = vadd.f32 %v132, %v790
  %v795 = vlaneseq
  %v796 = vshrl.u32 %v795, 7
  %v797 = vsub.s32 3, %v796
  %v798 = vrot.slane %v149, %v797
  %v799 = vadd.f32 %v793, %v798
  %v800 = vadd.f32 %v794, %v798
  %v801 = vsel %vm166, %v799, 0.0
  %802 = vadd.xlane.f32.xlu0 %v801
  %v803 = vpop.xlane.xlu0 %802
  %v804 = vsel %vm170, %v800, 0.0
  %805 = vadd.xlane.f32.xlu0 %v804
  %v806 = vpop.xlane.xlu0 %805
  %v807 = vmul.f32 %v803, %v174
  %v808 = vmul.f32 %v806, %v174
  %v809 = vsub.f32 %v799, %v807
  %v810 = vsub.f32 %v800, %v808
  %v811 = vmul.f32 %v809, %v809
  %v812 = vmul.f32 %v810, %v810
  %v813 = vsel %vm166, %v811, 0.0
  %814 = vadd.xlane.f32.xlu0 %v813
  %v815 = vpop.xlane.xlu0 %814
  %v816 = vsel %vm170, %v812, 0.0
  %817 = vadd.xlane.f32.xlu0 %v816
  %v818 = vpop.xlane.xlu0 %817
  %v819 = vmul.f32 %v815, %v174
  %v820 = vmul.f32 %v818, %v174
  %v821 = vadd.f32 %v819, 1e-12
  %v822 = vadd.f32 %v820, 1e-12
  %v823 = vrsqrt.pop %v821
  %v824 = vrsqrt.pop %v822
  %v825 = vmul.f32 %v809, %v823
  %v826 = vmul.f32 %v810, %v824
  %v827 = vlaneseq
  %v828 = vshrl.u32 %v827, 7
  %v829 = vsub.s32 4, %v828
  %v830 = vrot.slane %v149, %v829
  %v831 = vmul.f32 %v825, %v830
  %v832 = vmul.f32 %v826, %v830
  %v833 = vlaneseq
  %v834 = vshrl.u32 %v833, 7
  %v835 = vsub.s32 5, %v834
  %v836 = vrot.slane %v149, %v835
  %v837 = vadd.f32 %v831, %v836
  %v838 = vadd.f32 %v832, %v836
  %v839 = vlaneseq
  %v840 = vshrl.u32 %v839, 7
  %v841 = vsub.s32 6, %v840
  %v842 = vrot.slane %v149, %v841
  %v844 = vsel %vm166, %v837, 0
  %v847 = vsel %vm166, %v838, 0
  %849 = vmatprep.subr.mxu0 0.0
  %850 = vmatpush1.msra.mxu0 %v142
  %851 = vmatprep.subr.mxu0 0.0
  %852 = vmatpush1.msra.mxu0 %v144
  %853 = vmatprep.subr.mxu0 0.0
  %854 = vmatpush1.msra.mxu0 %v146
  %855 = vmatprep.subr.mxu0 0.0
  %856 = vmatpush1.msra.mxu0 %v148
  %857 = vmatprep.subr.mxu0 0.0
  %858 = vmatpush1.msra.mxu0 0.0
  %859 = vmatprep.subr.mxu0 0.0
  %860 = vmatpush1.msra.mxu0 0.0
  %861 = vmatprep.subr.mxu0 0.0
  %862 = vmatpush1.msra.mxu0 0.0
  %863 = vmatprep.subr.mxu0 0.0
  %864 = vmatpush1.msra.mxu0 0.0
  %865 = vmatprep.subr.mxu0 0.0
  %866 = vmatpush1.msra.mxu0 0.0
  %867 = vmatprep.subr.mxu0 0.0
  %868 = vmatpush1.msra.mxu0 0.0
  %869 = vmatprep.subr.mxu0 0.0
  %870 = vmatpush1.msra.mxu0 0.0
  %871 = vmatprep.subr.mxu0 0.0
  %872 = vmatpush1.msra.mxu0 0.0
  %873 = vmatprep.subr.mxu0 0.0
  %874 = vmatpush1.msra.mxu0 0.0
  %875 = vmatprep.subr.mxu0 0.0
  %876 = vmatpush1.msra.mxu0 0.0
  %877 = vmatprep.subr.mxu0 0.0
  %878 = vmatpush1.msra.mxu0 0.0
  %879 = vmatprep.subr.mxu0 0.0
  %880 = vmatpush1.msra.mxu0 0.0
  %881 = vmatprep.subr.mxu0 0.0
  %882 = vmatpush1.msra.mxu0 0.0
  %883 = vmatprep.subr.mxu0 0.0
  %884 = vmatpush1.msra.mxu0 0.0
  %885 = vmatprep.subr.mxu0 0.0
  %886 = vmatpush1.msra.mxu0 0.0
  %887 = vmatprep.subr.mxu0 0.0
  %888 = vmatpush1.msra.mxu0 0.0
  %889 = vmatprep.subr.mxu0 0.0
  %890 = vmatpush1.msra.mxu0 0.0
  %891 = vmatprep.subr.mxu0 0.0
  %892 = vmatpush1.msra.mxu0 0.0
  %893 = vmatprep.subr.mxu0 0.0
  %894 = vmatpush1.msra.mxu0 0.0
  %895 = vmatprep.subr.mxu0 0.0
  %896 = vmatpush1.msra.mxu0 0.0
  %897 = vmatprep.subr.mxu0 0.0
  %898 = vmatpush1.msra.mxu0 0.0
  %899 = vmatprep.subr.mxu0 0.0
  %900 = vmatpush1.msra.mxu0 0.0
  %901 = vmatprep.subr.mxu0 0.0
  %902 = vmatpush1.msra.mxu0 0.0
  %903 = vmatprep.subr.mxu0 0.0
  %904 = vmatpush1.msra.mxu0 0.0
  %905 = vmatprep.subr.mxu0 0.0
  %906 = vmatpush1.msra.mxu0 0.0
  %907 = vmatprep.subr.mxu0 0.0
  %908 = vmatpush1.msra.mxu0 0.0
  %909 = vmatprep.subr.mxu0 0.0
  %910 = vmatpush1.msra.mxu0 0.0
  %911 = vmatprep.subr.mxu0 0.0
  %912 = vmatpush1.msra.mxu0 0.0
  %913 = vmatprep.mubr.f32.mxu0 0.0
  %914 = vmatmul.mubr.f32.gmra.mrb[0].mxu0 %v844
  %v915 = vpop.f32.mrb[0].mxu0
  %v916 = vadd.f32 %v842, %v915
  %v917 = vpop.f32.mrb[0].mxu0
  %918 = vmatprep.mubr.f32.mxu0 0.0
  %919 = vmatmul.mubr.f32.gmra.mrb[0].mxu0 %v847
  %v920 = vpop.f32.mrb[0].mxu0
  %v921 = vadd.f32 %v842, %v920
  %v922 = vpop.f32.mrb[0].mxu0
  %923 = vdwg.mxu0
  %v924 = vmul.f32 %v916, %v916
  %v925 = vmul.f32 %v921, %v921
  %v926 = vmul.f32 %v916, %v924
  %v927 = vmul.f32 %v921, %v925
  %v928 = vmul.f32 %v926, 0.044715
  %v929 = vmul.f32 %v927, 0.044715
  %v930 = vadd.f32 %v916, %v928
  %v931 = vadd.f32 %v921, %v929
  %v932 = vmul.f32 %v930, 0.7978846
  %v933 = vmul.f32 %v931, 0.7978846
  %v934 = vtanh.pop %v932
  %v935 = vtanh.pop %v933
  %v936 = vadd.f32 %v934, 1.0
  %v937 = vadd.f32 %v935, 1.0
  %v938 = vmul.f32 %v936, 0.5
  %v939 = vmul.f32 %v937, 0.5
  %v940 = vmul.f32 %v916, %v938
  %v941 = vmul.f32 %v921, %v939
  %942 = vmatprep.subr.mxu0 0.0
  %943 = vmatpush1.msra.mxu0 %v150
  %944 = vmatprep.subr.mxu0 0.0
  %945 = vmatpush1.msra.mxu0 %v151
  %946 = vmatprep.subr.mxu0 0.0
  %947 = vmatpush1.msra.mxu0 %v152
  %948 = vmatprep.subr.mxu0 0.0
  %949 = vmatpush1.msra.mxu0 %v153
  %950 = vmatprep.subr.mxu0 0.0
  %951 = vmatpush1.msra.mxu0 %v154
  %952 = vmatprep.subr.mxu0 0.0
  %953 = vmatpush1.msra.mxu0 %v155
  %954 = vmatprep.subr.mxu0 0.0
  %955 = vmatpush1.msra.mxu0 %v156
  %956 = vmatprep.subr.mxu0 0.0
  %957 = vmatpush1.msra.mxu0 %v157
  %958 = vmatprep.subr.mxu0 0.0
  %959 = vmatpush1.msra.mxu0 %v158
  %960 = vmatprep.subr.mxu0 0.0
  %961 = vmatpush1.msra.mxu0 %v159
  %962 = vmatprep.subr.mxu0 0.0
  %963 = vmatpush1.msra.mxu0 %v160
  %964 = vmatprep.subr.mxu0 0.0
  %965 = vmatpush1.msra.mxu0 %v161
  %966 = vmatprep.subr.mxu0 0.0
  %967 = vmatpush1.msra.mxu0 %v162
  %968 = vmatprep.subr.mxu0 0.0
  %969 = vmatpush1.msra.mxu0 %v163
  %970 = vmatprep.subr.mxu0 0.0
  %971 = vmatpush1.msra.mxu0 %v164
  %972 = vmatprep.subr.mxu0 0.0
  %973 = vmatpush1.msra.mxu0 %v165
  %974 = vmatprep.subr.mxu0 0.0
  %975 = vmatpush1.msra.mxu0 0.0
  %976 = vmatprep.subr.mxu0 0.0
  %977 = vmatpush1.msra.mxu0 0.0
  %978 = vmatprep.subr.mxu0 0.0
  %979 = vmatpush1.msra.mxu0 0.0
  %980 = vmatprep.subr.mxu0 0.0
  %981 = vmatpush1.msra.mxu0 0.0
  %982 = vmatprep.subr.mxu0 0.0
  %983 = vmatpush1.msra.mxu0 0.0
  %984 = vmatprep.subr.mxu0 0.0
  %985 = vmatpush1.msra.mxu0 0.0
  %986 = vmatprep.subr.mxu0 0.0
  %987 = vmatpush1.msra.mxu0 0.0
  %988 = vmatprep.subr.mxu0 0.0
  %989 = vmatpush1.msra.mxu0 0.0
  %990 = vmatprep.subr.mxu0 0.0
  %991 = vmatpush1.msra.mxu0 0.0
  %992 = vmatprep.subr.mxu0 0.0
  %993 = vmatpush1.msra.mxu0 0.0
  %994 = vmatprep.subr.mxu0 0.0
  %995 = vmatpush1.msra.mxu0 0.0
  %996 = vmatprep.subr.mxu0 0.0
  %997 = vmatpush1.msra.mxu0 0.0
  %998 = vmatprep.subr.mxu0 0.0
  %999 = vmatpush1.msra.mxu0 0.0
  %1000 = vmatprep.subr.mxu0 0.0
  %1001 = vmatpush1.msra.mxu0 0.0
  %1002 = vmatprep.subr.mxu0 0.0
  %1003 = vmatpush1.msra.mxu0 0.0
  %1004 = vmatprep.subr.mxu0 0.0
  %1005 = vmatpush1.msra.mxu0 0.0
  %1006 = vmatprep.mubr.f32.mxu0 0.0
  %1007 = vmatmul.mubr.f32.gmra.mrb[0].mxu0 %v940
  %v1008 = vpop.f32.mrb[0].mxu0
  %v1009 = vadd.f32 0.0, %v1008
  %v1010 = vpop.f32.mrb[0].mxu0
  %1011 = vmatprep.mubr.f32.mxu0 0.0
  %1012 = vmatmul.mubr.f32.gmra.mrb[0].mxu0 %v941
  %v1013 = vpop.f32.mrb[0].mxu0
  %v1014 = vadd.f32 0.0, %v1013
  %v1015 = vpop.f32.mrb[0].mxu0
  %1016 = vdwg.mxu0
  %v1017 = vadd.f32 %v799, %v1009
  %v1018 = vadd.f32 %v800, %v1014
  %v1019 = vlaneseq
  %v1020 = vshrl.u32 %v1019, 7
  %v1021 = vsub.s32 7, %v1020
  %v1022 = vrot.slane %v149, %v1021
  %v1023 = vadd.f32 %v1017, %v1022
  %v1024 = vadd.f32 %v1018, %v1022
  %s1025 = scalar_lea.vmem %s3, 64
  %v1026 = vld [vmem:[%s1025] sm:$0xff]
  %v1027 = vld [vmem:[%s1025 + $0x8] sm:$0xff]
  %v1028 = vld [vmem:[%s1025 + $0x10] sm:$0xff]
  %v1029 = vld [vmem:[%s1025 + $0x18] sm:$0xff]
  %v1030 = vld [vmem:[%s1025 + $0x20] sm:$0xff]
  %v1031 = vld [vmem:[%s1025 + $0x28] sm:$0xff]
  %v1032 = vld [vmem:[%s1025 + $0x30] sm:$0xff]
  %v1033 = vld [vmem:[%s1025 + $0x38] sm:$0xff]
  %s1034 = scalar_lea.vmem %s4, 8
  %v1035 = vld [vmem:[%s1034] sm:$0xff]
  %v1036 = vld [vmem:[%s1 + $0x140] sm:$0xff]
  %v1037 = vld [vmem:[%s1 + $0x148] sm:$0xff]
  %v1038 = vld [vmem:[%s1 + $0x150] sm:$0xff]
  %v1039 = vld [vmem:[%s1 + $0x158] sm:$0xff]
  %v1040 = vld [vmem:[%s1 + $0x160] sm:$0xff]
  %v1041 = vld [vmem:[%s1 + $0x168] sm:$0xff]
  %v1042 = vld [vmem:[%s1 + $0x170] sm:$0xff]
  %v1043 = vld [vmem:[%s1 + $0x178] sm:$0xff]
  %v1044 = vld [vmem:[%s1 + $0x180] sm:$0xff]
  %v1045 = vld [vmem:[%s1 + $0x188] sm:$0xff]
  %v1046 = vld [vmem:[%s1 + $0x190] sm:$0xff]
  %v1047 = vld [vmem:[%s1 + $0x198] sm:$0xff]
  %v1048 = vld [vmem:[%s1 + $0x1a0] sm:$0xff]
  %v1049 = vld [vmem:[%s1 + $0x1a8] sm:$0xff]
  %v1050 = vld [vmem:[%s1 + $0x1b0] sm:$0xff]
  %v1051 = vld [vmem:[%s1 + $0x1b8] sm:$0xff]
  %v1052 = vsel %vm166, %v1023, 0.0
  %1053 = vadd.xlane.f32.xlu0 %v1052
  %v1054 = vpop.xlane.xlu0 %1053
  %v1055 = vsel %vm170, %v1024, 0.0
  %1056 = vadd.xlane.f32.xlu0 %v1055
  %v1057 = vpop.xlane.xlu0 %1056
  %v1058 = vmul.f32 %v1054, %v174
  %v1059 = vmul.f32 %v1057, %v174
  %v1060 = vsub.f32 %v1023, %v1058
  %v1061 = vsub.f32 %v1024, %v1059
  %v1062 = vmul.f32 %v1060, %v1060
  %v1063 = vmul.f32 %v1061, %v1061
  %v1064 = vsel %vm166, %v1062, 0.0
  %1065 = vadd.xlane.f32.xlu0 %v1064
  %v1066 = vpop.xlane.xlu0 %1065
  %v1067 = vsel %vm170, %v1063, 0.0
  %1068 = vadd.xlane.f32.xlu0 %v1067
  %v1069 = vpop.xlane.xlu0 %1068
  %v1070 = vmul.f32 %v1066, %v174
  %v1071 = vmul.f32 %v1069, %v174
  %v1072 = vadd.f32 %v1070, 1e-12
  %v1073 = vadd.f32 %v1071, 1e-12
  %v1074 = vrsqrt.pop %v1072
  %v1075 = vrsqrt.pop %v1073
  %v1076 = vmul.f32 %v1060, %v1074
  %v1077 = vmul.f32 %v1061, %v1075
  %v1078 = vlaneseq
  %v1079 = vshrl.u32 %v1078, 7
  %v1080 = vsub.s32 0, %v1079
  %v1081 = vrot.slane %v1035, %v1080
  %v1082 = vmul.f32 %v1076, %v1081
  %v1083 = vmul.f32 %v1077, %v1081
  %v1084 = vlaneseq
  %v1085 = vshrl.u32 %v1084, 7
  %v1086 = vsub.s32 1, %v1085
  %v1087 = vrot.slane %v1035, %v1086
  %v1088 = vadd.f32 %v1082, %v1087
  %v1089 = vadd.f32 %v1083, %v1087
  %v1090 = vlaneseq
  %v1091 = vshrl.u32 %v1090, 7
  %v1092 = vsub.s32 2, %v1091
  %v1093 = vrot.slane %v1035, %v1092
  %v1095 = vsel %vm166, %v1088, 0
  %v1098 = vsel %vm166, %v1089, 0
  %1100 = vmatprep.subr.mxu0 0.0
  %1101 = vmatpush1.msra.mxu0 %v1026
  %1102 = vmatprep.subr.mxu0 0.0
  %1103 = vmatpush1.msra.mxu0 %v1028
  %1104 = vmatprep.subr.mxu0 0.0
  %1105 = vmatpush1.msra.mxu0 %v1030
  %1106 = vmatprep.subr.mxu0 0.0
  %1107 = vmatpush1.msra.mxu0 %v1032
  %1108 = vmatprep.subr.mxu0 0.0
  %1109 = vmatpush1.msra.mxu0 0.0
  %1110 = vmatprep.subr.mxu0 0.0
  %1111 = vmatpush1.msra.mxu0 0.0
  %1112 = vmatprep.subr.mxu0 0.0
  %1113 = vmatpush1.msra.mxu0 0.0
  %1114 = vmatprep.subr.mxu0 0.0
  %1115 = vmatpush1.msra.mxu0 0.0
  %1116 = vmatprep.subr.mxu0 0.0
  %1117 = vmatpush1.msra.mxu0 0.0
  %1118 = vmatprep.subr.mxu0 0.0
  %1119 = vmatpush1.msra.mxu0 0.0
  %1120 = vmatprep.subr.mxu0 0.0
  %1121 = vmatpush1.msra.mxu0 0.0
  %1122 = vmatprep.subr.mxu0 0.0
  %1123 = vmatpush1.msra.mxu0 0.0
  %1124 = vmatprep.subr.mxu0 0.0
  %1125 = vmatpush1.msra.mxu0 0.0
  %1126 = vmatprep.subr.mxu0 0.0
  %1127 = vmatpush1.msra.mxu0 0.0
  %1128 = vmatprep.subr.mxu0 0.0
  %1129 = vmatpush1.msra.mxu0 0.0
  %1130 = vmatprep.subr.mxu0 0.0
  %1131 = vmatpush1.msra.mxu0 0.0
  %1132 = vmatprep.subr.mxu0 0.0
  %1133 = vmatpush1.msra.mxu0 0.0
  %1134 = vmatprep.subr.mxu0 0.0
  %1135 = vmatpush1.msra.mxu0 0.0
  %1136 = vmatprep.subr.mxu0 0.0
  %1137 = vmatpush1.msra.mxu0 0.0
  %1138 = vmatprep.subr.mxu0 0.0
  %1139 = vmatpush1.msra.mxu0 0.0
  %1140 = vmatprep.subr.mxu0 0.0
  %1141 = vmatpush1.msra.mxu0 0.0
  %1142 = vmatprep.subr.mxu0 0.0
  %1143 = vmatpush1.msra.mxu0 0.0
  %1144 = vmatprep.subr.mxu0 0.0
  %1145 = vmatpush1.msra.mxu0 0.0
  %1146 = vmatprep.subr.mxu0 0.0
  %1147 = vmatpush1.msra.mxu0 0.0
  %1148 = vmatprep.subr.mxu0 0.0
  %1149 = vmatpush1.msra.mxu0 0.0
  %1150 = vmatprep.subr.mxu0 0.0
  %1151 = vmatpush1.msra.mxu0 0.0
  %1152 = vmatprep.subr.mxu0 0.0
  %1153 = vmatpush1.msra.mxu0 0.0
  %1154 = vmatprep.subr.mxu0 0.0
  %1155 = vmatpush1.msra.mxu0 0.0
  %1156 = vmatprep.subr.mxu0 0.0
  %1157 = vmatpush1.msra.mxu0 0.0
  %1158 = vmatprep.subr.mxu0 0.0
  %1159 = vmatpush1.msra.mxu0 0.0
  %1160 = vmatprep.subr.mxu0 0.0
  %1161 = vmatpush1.msra.mxu0 0.0
  %1162 = vmatprep.subr.mxu0 0.0
  %1163 = vmatpush1.msra.mxu0 0.0
  %1164 = vmatprep.mubr.f32.mxu0 0.0
  %1165 = vmatmul.mubr.f32.gmra.mrb[0].mxu0 %v1095
  %v1166 = vpop.f32.mrb[0].mxu0
  %v1167 = vadd.f32 %v1093, %v1166
  %v1168 = vpop.f32.mrb[0].mxu0
  %1169 = vmatprep.mubr.f32.mxu0 0.0
  %1170 = vmatmul.mubr.f32.gmra.mrb[0].mxu0 %v1098
  %v1171 = vpop.f32.mrb[0].mxu0
  %v1172 = vadd.f32 %v1093, %v1171
  %v1173 = vpop.f32.mrb[0].mxu0
  %1174 = vdwg.mxu0
  %v1177 = vrot.slane %v1167, 4
  %v1178 = vrot.slane %v1172, 4
  %v1179 = vsel %vm294, %v1177, %v1178
  %1180 = vrot.lane.b32.xlu0 %v1177, 104
  %v1181 = vpop.permute.xlu0 %1180
  %1182 = vrot.lane.b32.xlu0 %v1179, 104
  %v1183 = vpop.permute.xlu0 %1182
  %1185 = vrot.lane.b32.xlu0 %v1167, 80
  %v1186 = vpop.permute.xlu0 %1185
  %1187 = vrot.lane.b32.xlu0 %v1172, 80
  %v1188 = vpop.permute.xlu0 %1187
  %1190 = vrot.lane.b32.xlu0 %v1177, 56
  %v1191 = vpop.permute.xlu0 %1190
  %1192 = vrot.lane.b32.xlu0 %v1179, 56
  %v1193 = vpop.permute.xlu0 %1192
  %v1195 = vsel %vm294, %v1172, %v1181
  %v1196 = vsel %vm294, %v1188, %v1191
  %1199 = vrot.lane.b32.xlu0 %v1167, 120
  %v1200 = vpop.permute.xlu0 %1199
  %1201 = vrot.lane.b32.xlu0 %v1195, 120
  %v1202 = vpop.permute.xlu0 %1201
  %1203 = vrot.lane.b32.xlu0 %v1183, 120
  %v1204 = vpop.permute.xlu0 %1203
  %1205 = vrot.lane.b32.xlu0 %v1186, 120
  %v1206 = vpop.permute.xlu0 %1205
  %1207 = vrot.lane.b32.xlu0 %v1196, 120
  %v1208 = vpop.permute.xlu0 %1207
  %1209 = vrot.lane.b32.xlu0 %v1193, 120
  %v1210 = vpop.permute.xlu0 %1209
  %v1211 = vsel %vm329, %v1167, 0
  %v1213 = vsel %vm329, %v1195, 0
  %v1215 = vsel %vm329, %v1183, 0
  %v1217 = vsel %vm329, %v1186, 0
  %v1219 = vsel %vm329, %v1196, 0
  %v1221 = vsel %vm329, %v1193, 0
  %v1223 = vsel %vm329, %v1200, 0
  %v1225 = vsel %vm329, %v1202, 0
  %v1227 = vsel %vm329, %v1204, 0
  %v1229 = vsel %vm329, %v1206, 0
  %v1231 = vsel %vm329, %v1208, 0
  %v1233 = vsel %vm329, %v1210, 0
  %1235 = vmatprep.subr.mxu0 0.0
  %1236 = vmatpush1.xpose.msra.mxu0 %v1223
  %1237 = vmatprep.subr.mxu0 0.0
  %1238 = vmatpush1.xpose.msra.mxu0 %v1225
  %1239 = vmatprep.subr.mxu0 0.0
  %1240 = vmatpush1.xpose.msra.mxu0 %v1227
  %1241 = vmatprep.subr.mxu0 0.0
  %1242 = vmatpush1.xpose.msra.mxu0 %v1229
  %1243 = vmatprep.subr.mxu0 0.0
  %1244 = vmatpush1.xpose.msra.mxu0 %v1231
  %1245 = vmatprep.subr.mxu0 0.0
  %1246 = vmatpush1.xpose.msra.mxu0 %v1233
  %1247 = vmatprep.subr.mxu0 0.0
  %1248 = vmatpush1.xpose.msra.mxu0 0.0
  %1249 = vmatprep.subr.mxu0 0.0
  %1250 = vmatpush1.xpose.msra.mxu0 0.0
  %1251 = vmatprep.subr.mxu0 0.0
  %1252 = vmatpush1.xpose.msra.mxu0 0.0
  %1253 = vmatprep.subr.mxu0 0.0
  %1254 = vmatpush1.xpose.msra.mxu0 0.0
  %1255 = vmatprep.subr.mxu0 0.0
  %1256 = vmatpush1.xpose.msra.mxu0 0.0
  %1257 = vmatprep.subr.mxu0 0.0
  %1258 = vmatpush1.xpose.msra.mxu0 0.0
  %1259 = vmatprep.subr.mxu0 0.0
  %1260 = vmatpush1.xpose.msra.mxu0 0.0
  %1261 = vmatprep.subr.mxu0 0.0
  %1262 = vmatpush1.xpose.msra.mxu0 0.0
  %1263 = vmatprep.subr.mxu0 0.0
  %1264 = vmatpush1.xpose.msra.mxu0 0.0
  %1265 = vmatprep.subr.mxu0 0.0
  %1266 = vmatpush1.xpose.msra.mxu0 0.0
  %1267 = vmatprep.subr.mxu0 0.0
  %1268 = vmatpush1.xpose.msra.mxu0 0.0
  %1269 = vmatprep.subr.mxu0 0.0
  %1270 = vmatpush1.xpose.msra.mxu0 0.0
  %1271 = vmatprep.subr.mxu0 0.0
  %1272 = vmatpush1.xpose.msra.mxu0 0.0
  %1273 = vmatprep.subr.mxu0 0.0
  %1274 = vmatpush1.xpose.msra.mxu0 0.0
  %1275 = vmatprep.subr.mxu0 0.0
  %1276 = vmatpush1.xpose.msra.mxu0 0.0
  %1277 = vmatprep.subr.mxu0 0.0
  %1278 = vmatpush1.xpose.msra.mxu0 0.0
  %1279 = vmatprep.subr.mxu0 0.0
  %1280 = vmatpush1.xpose.msra.mxu0 0.0
  %1281 = vmatprep.subr.mxu0 0.0
  %1282 = vmatpush1.xpose.msra.mxu0 0.0
  %1283 = vmatprep.subr.mxu0 0.0
  %1284 = vmatpush1.xpose.msra.mxu0 0.0
  %1285 = vmatprep.subr.mxu0 0.0
  %1286 = vmatpush1.xpose.msra.mxu0 0.0
  %1287 = vmatprep.subr.mxu0 0.0
  %1288 = vmatpush1.xpose.msra.mxu0 0.0
  %1289 = vmatprep.subr.mxu0 0.0
  %1290 = vmatpush1.xpose.msra.mxu0 0.0
  %1291 = vmatprep.subr.mxu0 0.0
  %1292 = vmatpush1.xpose.msra.mxu0 0.0
  %1293 = vmatprep.subr.mxu0 0.0
  %1294 = vmatpush1.xpose.msra.mxu0 0.0
  %1295 = vmatprep.subr.mxu0 0.0
  %1296 = vmatpush1.xpose.msra.mxu0 0.0
  %1297 = vmatprep.subr.mxu0 0.0
  %1298 = vmatpush1.xpose.msra.mxu0 0.0
  %1299 = vmatprep.mubr.f32.mxu0 0.0
  %1300 = vmatmul.mubr.f32.gmra.mrb[0].mxu0 %v1211
  %v1301 = vpop.f32.mrb[0].mxu0
  %v1302 = vadd.f32 0.0, %v1301
  %v1303 = vpop.f32.mrb[0].mxu0
  %1304 = vmatprep.mubr.f32.mxu0 0.0
  %1305 = vmatmul.mubr.f32.gmra.mrb[0].mxu0 %v1213
  %v1306 = vpop.f32.mrb[0].mxu0
  %v1307 = vadd.f32 0.0, %v1306
  %v1308 = vpop.f32.mrb[0].mxu0
  %1309 = vmatprep.mubr.f32.mxu0 0.0
  %1310 = vmatmul.mubr.f32.gmra.mrb[0].mxu0 %v1215
  %v1311 = vpop.f32.mrb[0].mxu0
  %v1312 = vadd.f32 0.0, %v1311
  %v1313 = vpop.f32.mrb[0].mxu0
  %1314 = vmatprep.mubr.f32.mxu0 0.0
  %1315 = vmatmul.mubr.f32.gmra.mrb[0].mxu0 %v1217
  %v1316 = vpop.f32.mrb[0].mxu0
  %v1317 = vadd.f32 0.0, %v1316
  %v1318 = vpop.f32.mrb[0].mxu0
  %1319 = vmatprep.mubr.f32.mxu0 0.0
  %1320 = vmatmul.mubr.f32.gmra.mrb[0].mxu0 %v1219
  %v1321 = vpop.f32.mrb[0].mxu0
  %v1322 = vadd.f32 0.0, %v1321
  %v1323 = vpop.f32.mrb[0].mxu0
  %1324 = vmatprep.mubr.f32.mxu0 0.0
  %1325 = vmatmul.mubr.f32.gmra.mrb[0].mxu0 %v1221
  %v1326 = vpop.f32.mrb[0].mxu0
  %v1327 = vadd.f32 0.0, %v1326
  %v1328 = vpop.f32.mrb[0].mxu0
  %1329 = vdwg.mxu0
  %v1330 = vmul.f32 %v1302, 0.35355338
  %v1331 = vmul.f32 %v1307, 0.35355338
  %v1332 = vmul.f32 %v1312, 0.35355338
  %v1333 = vmul.f32 %v1317, 0.35355338
  %v1334 = vmul.f32 %v1322, 0.35355338
  %v1335 = vmul.f32 %v1327, 0.35355338
  %v1336 = vadd.f32 %v1330, %v135
  %v1337 = vadd.f32 %v1331, %v136
  %v1338 = vadd.f32 %v1332, %v137
  %v1339 = vadd.f32 %v1333, %v138
  %v1340 = vadd.f32 %v1334, %v139
  %v1341 = vadd.f32 %v1335, %v140
  %v1342 = vsel %vm461, %v1336, -inf
  %1343 = vmax.xlane.f32.xlu0 %v1342
  %v1344 = vpop.xlane.xlu0 %1343
  %v1345 = vsel %vm461, %v1337, -inf
  %1346 = vmax.xlane.f32.xlu0 %v1345
  %v1347 = vpop.xlane.xlu0 %1346
  %v1348 = vsel %vm461, %v1338, -inf
  %1349 = vmax.xlane.f32.xlu0 %v1348
  %v1350 = vpop.xlane.xlu0 %1349
  %v1351 = vsel %vm461, %v1339, -inf
  %1352 = vmax.xlane.f32.xlu0 %v1351
  %v1353 = vpop.xlane.xlu0 %1352
  %v1354 = vsel %vm461, %v1340, -inf
  %1355 = vmax.xlane.f32.xlu0 %v1354
  %v1356 = vpop.xlane.xlu0 %1355
  %v1357 = vsel %vm461, %v1341, -inf
  %1358 = vmax.xlane.f32.xlu0 %v1357
  %v1359 = vpop.xlane.xlu0 %1358
  %v1360 = vsub.f32 %v1336, %v1344
  %v1361 = vsub.f32 %v1337, %v1347
  %v1362 = vsub.f32 %v1338, %v1350
  %v1363 = vsub.f32 %v1339, %v1353
  %v1364 = vsub.f32 %v1340, %v1356
  %v1365 = vsub.f32 %v1341, %v1359
  %v1366 = vmul.f32 %v1360, 1.442695
  %v1367 = vpow.pop %v1366
  %v1368 = vmul.f32 %v1361, 1.442695
  %v1369 = vpow.pop %v1368
  %v1370 = vmul.f32 %v1362, 1.442695
  %v1371 = vpow.pop %v1370
  %v1372 = vmul.f32 %v1363, 1.442695
  %v1373 = vpow.pop %v1372
  %v1374 = vmul.f32 %v1364, 1.442695
  %v1375 = vpow.pop %v1374
  %v1376 = vmul.f32 %v1365, 1.442695
  %v1377 = vpow.pop %v1376
  %v1378 = vsel %vm461, %v1367, 0.0
  %1379 = vadd.xlane.f32.xlu0 %v1378
  %v1380 = vpop.xlane.xlu0 %1379
  %v1381 = vsel %vm461, %v1369, 0.0
  %1382 = vadd.xlane.f32.xlu0 %v1381
  %v1383 = vpop.xlane.xlu0 %1382
  %v1384 = vsel %vm461, %v1371, 0.0
  %1385 = vadd.xlane.f32.xlu0 %v1384
  %v1386 = vpop.xlane.xlu0 %1385
  %v1387 = vsel %vm461, %v1373, 0.0
  %1388 = vadd.xlane.f32.xlu0 %v1387
  %v1389 = vpop.xlane.xlu0 %1388
  %v1390 = vsel %vm461, %v1375, 0.0
  %1391 = vadd.xlane.f32.xlu0 %v1390
  %v1392 = vpop.xlane.xlu0 %1391
  %v1393 = vsel %vm461, %v1377, 0.0
  %1394 = vadd.xlane.f32.xlu0 %v1393
  %v1395 = vpop.xlane.xlu0 %1394
  %v1396 = vrcp.pop %v1380
  %v1397 = vrcp.pop %v1383
  %v1398 = vrcp.pop %v1386
  %v1399 = vrcp.pop %v1389
  %v1400 = vrcp.pop %v1392
  %v1401 = vrcp.pop %v1395
  %v1402 = vmul.f32 %v1367, %v1396
  %v1403 = vmul.f32 %v1369, %v1397
  %v1404 = vmul.f32 %v1371, %v1398
  %v1405 = vmul.f32 %v1373, %v1399
  %v1406 = vmul.f32 %v1375, %v1400
  %v1407 = vmul.f32 %v1377, %v1401
  %1408 = vrot.lane.b32.xlu0 %v1167, 112
  %v1409 = vpop.permute.xlu0 %1408
  %1410 = vrot.lane.b32.xlu0 %v1195, 112
  %v1411 = vpop.permute.xlu0 %1410
  %1412 = vrot.lane.b32.xlu0 %v1183, 112
  %v1413 = vpop.permute.xlu0 %1412
  %1414 = vrot.lane.b32.xlu0 %v1186, 112
  %v1415 = vpop.permute.xlu0 %1414
  %1416 = vrot.lane.b32.xlu0 %v1196, 112
  %v1417 = vpop.permute.xlu0 %1416
  %1418 = vrot.lane.b32.xlu0 %v1193, 112
  %v1419 = vpop.permute.xlu0 %1418
  %v1427 = vsel %vm461, %v1402, 0
  %v1430 = vsel %vm461, %v1403, 0
  %v1433 = vsel %vm461, %v1404, 0
  %v1436 = vsel %vm461, %v1405, 0
  %v1439 = vsel %vm461, %v1406, 0
  %v1442 = vsel %vm461, %v1407, 0
  %1444 = vmatprep.subr.mxu0 0.0
  %1445 = vmatpush1.msra.mxu0 %v1409
  %1446 = vmatprep.subr.mxu0 0.0
  %1447 = vmatpush1.msra.mxu0 %v1411
  %1448 = vmatprep.subr.mxu0 0.0
  %1449 = vmatpush1.msra.mxu0 %v1413
  %1450 = vmatprep.subr.mxu0 0.0
  %1451 = vmatpush1.msra.mxu0 %v1415
  %1452 = vmatprep.subr.mxu0 0.0
  %1453 = vmatpush1.msra.mxu0 %v1417
  %1454 = vmatprep.subr.mxu0 0.0
  %1455 = vmatpush1.msra.mxu0 %v1419
  %1456 = vmatprep.subr.mxu0 0.0
  %1457 = vmatpush1.msra.mxu0 0.0
  %1458 = vmatprep.subr.mxu0 0.0
  %1459 = vmatpush1.msra.mxu0 0.0
  %1460 = vmatprep.subr.mxu0 0.0
  %1461 = vmatpush1.msra.mxu0 0.0
  %1462 = vmatprep.subr.mxu0 0.0
  %1463 = vmatpush1.msra.mxu0 0.0
  %1464 = vmatprep.subr.mxu0 0.0
  %1465 = vmatpush1.msra.mxu0 0.0
  %1466 = vmatprep.subr.mxu0 0.0
  %1467 = vmatpush1.msra.mxu0 0.0
  %1468 = vmatprep.subr.mxu0 0.0
  %1469 = vmatpush1.msra.mxu0 0.0
  %1470 = vmatprep.subr.mxu0 0.0
  %1471 = vmatpush1.msra.mxu0 0.0
  %1472 = vmatprep.subr.mxu0 0.0
  %1473 = vmatpush1.msra.mxu0 0.0
  %1474 = vmatprep.subr.mxu0 0.0
  %1475 = vmatpush1.msra.mxu0 0.0
  %1476 = vmatprep.subr.mxu0 0.0
  %1477 = vmatpush1.msra.mxu0 0.0
  %1478 = vmatprep.subr.mxu0 0.0
  %1479 = vmatpush1.msra.mxu0 0.0
  %1480 = vmatprep.subr.mxu0 0.0
  %1481 = vmatpush1.msra.mxu0 0.0
  %1482 = vmatprep.subr.mxu0 0.0
  %1483 = vmatpush1.msra.mxu0 0.0
  %1484 = vmatprep.subr.mxu0 0.0
  %1485 = vmatpush1.msra.mxu0 0.0
  %1486 = vmatprep.subr.mxu0 0.0
  %1487 = vmatpush1.msra.mxu0 0.0
  %1488 = vmatprep.subr.mxu0 0.0
  %1489 = vmatpush1.msra.mxu0 0.0
  %1490 = vmatprep.subr.mxu0 0.0
  %1491 = vmatpush1.msra.mxu0 0.0
  %1492 = vmatprep.subr.mxu0 0.0
  %1493 = vmatpush1.msra.mxu0 0.0
  %1494 = vmatprep.subr.mxu0 0.0
  %1495 = vmatpush1.msra.mxu0 0.0
  %1496 = vmatprep.subr.mxu0 0.0
  %1497 = vmatpush1.msra.mxu0 0.0
  %1498 = vmatprep.subr.mxu0 0.0
  %1499 = vmatpush1.msra.mxu0 0.0
  %1500 = vmatprep.subr.mxu0 0.0
  %1501 = vmatpush1.msra.mxu0 0.0
  %1502 = vmatprep.subr.mxu0 0.0
  %1503 = vmatpush1.msra.mxu0 0.0
  %1504 = vmatprep.subr.mxu0 0.0
  %1505 = vmatpush1.msra.mxu0 0.0
  %1506 = vmatprep.subr.mxu0 0.0
  %1507 = vmatpush1.msra.mxu0 0.0
  %1508 = vmatprep.mubr.f32.mxu0 0.0
  %1509 = vmatmul.mubr.f32.gmra.mrb[0].mxu0 %v1427
  %v1510 = vpop.f32.mrb[0].mxu0
  %v1511 = vadd.f32 0.0, %v1510
  %v1512 = vpop.f32.mrb[0].mxu0
  %1513 = vmatprep.mubr.f32.mxu0 0.0
  %1514 = vmatmul.mubr.f32.gmra.mrb[0].mxu0 %v1430
  %v1515 = vpop.f32.mrb[0].mxu0
  %v1516 = vadd.f32 0.0, %v1515
  %v1517 = vpop.f32.mrb[0].mxu0
  %1518 = vmatprep.mubr.f32.mxu0 0.0
  %1519 = vmatmul.mubr.f32.gmra.mrb[0].mxu0 %v1433
  %v1520 = vpop.f32.mrb[0].mxu0
  %v1521 = vadd.f32 0.0, %v1520
  %v1522 = vpop.f32.mrb[0].mxu0
  %1523 = vmatprep.mubr.f32.mxu0 0.0
  %1524 = vmatmul.mubr.f32.gmra.mrb[0].mxu0 %v1436
  %v1525 = vpop.f32.mrb[0].mxu0
  %v1526 = vadd.f32 0.0, %v1525
  %v1527 = vpop.f32.mrb[0].mxu0
  %1528 = vmatprep.mubr.f32.mxu0 0.0
  %1529 = vmatmul.mubr.f32.gmra.mrb[0].mxu0 %v1439
  %v1530 = vpop.f32.mrb[0].mxu0
  %v1531 = vadd.f32 0.0, %v1530
  %v1532 = vpop.f32.mrb[0].mxu0
  %1533 = vmatprep.mubr.f32.mxu0 0.0
  %1534 = vmatmul.mubr.f32.gmra.mrb[0].mxu0 %v1442
  %v1535 = vpop.f32.mrb[0].mxu0
  %v1536 = vadd.f32 0.0, %v1535
  %v1537 = vpop.f32.mrb[0].mxu0
  %1538 = vdwg.mxu0
  %v1541 = vrot.slane %v1516, 4
  %v1542 = vrot.slane %v1521, 4
  %v1543 = vsel %vm294, %v1541, %v1542
  %1544 = vrot.lane.b32.xlu0 %v1543, 8
  %v1545 = vpop.permute.xlu0 %1544
  %1546 = vrot.lane.b32.xlu0 %v1542, 8
  %v1547 = vpop.permute.xlu0 %1546
  %1552 = vrot.lane.b32.xlu0 %v1526, 16
  %v1553 = vpop.permute.xlu0 %1552
  %1554 = vrot.lane.b32.xlu0 %v1531, 16
  %v1555 = vpop.permute.xlu0 %1554
  %v1559 = vrot.slane %v1531, 4
  %v1560 = vrot.slane %v1536, 4
  %v1561 = vsel %vm294, %v1559, %v1560
  %1562 = vrot.lane.b32.xlu0 %v1561, 24
  %v1563 = vpop.permute.xlu0 %1562
  %1564 = vrot.lane.b32.xlu0 %v1560, 24
  %v1565 = vpop.permute.xlu0 %1564
  %v1568 = vsel %vm329, %v1511, %v1545
  %v1569 = vsel %vm329, %v1516, %v1547
  %v1570 = vsel %vm690, %v1568, %v1553
  %v1571 = vsel %vm690, %v1569, %v1555
  %v1572 = vsel %vm693, %v1570, %v1563
  %v1573 = vsel %vm693, %v1571, %v1565
  %1578 = vrot.lane.b32.xlu0 %v1026, 32
  %v1579 = vpop.permute.xlu0 %1578
  %1580 = vrot.lane.b32.xlu0 %v1028, 32
  %v1581 = vpop.permute.xlu0 %1580
  %1582 = vrot.lane.b32.xlu0 %v1030, 32
  %v1583 = vpop.permute.xlu0 %1582
  %1584 = vrot.lane.b32.xlu0 %v1032, 32
  %v1585 = vpop.permute.xlu0 %1584
  %v1591 = vsel %vm166, %v1572, 0
  %v1594 = vsel %vm166, %v1573, 0
  %1596 = vmatprep.subr.mxu0 0.0
  %1597 = vmatpush1.msra.mxu0 %v1579
  %1598 = vmatprep.subr.mxu0 0.0
  %1599 = vmatpush1.msra.mxu0 %v1581
  %1600 = vmatprep.subr.mxu0 0.0
  %1601 = vmatpush1.msra.mxu0 %v1583
  %1602 = vmatprep.subr.mxu0 0.0
  %1603 = vmatpush1.msra.mxu0 %v1585
  %1604 = vmatprep.subr.mxu0 0.0
  %1605 = vmatpush1.msra.mxu0 0.0
  %1606 = vmatprep.subr.mxu0 0.0
  %1607 = vmatpush1.msra.mxu0 0.0
  %1608 = vmatprep.subr.mxu0 0.0
  %1609 = vmatpush1.msra.mxu0 0.0
  %1610 = vmatprep.subr.mxu0 0.0
  %1611 = vmatpush1.msra.mxu0 0.0
  %1612 = vmatprep.subr.mxu0 0.0
  %1613 = vmatpush1.msra.mxu0 0.0
  %1614 = vmatprep.subr.mxu0 0.0
  %1615 = vmatpush1.msra.mxu0 0.0
  %1616 = vmatprep.subr.mxu0 0.0
  %1617 = vmatpush1.msra.mxu0 0.0
  %1618 = vmatprep.subr.mxu0 0.0
  %1619 = vmatpush1.msra.mxu0 0.0
  %1620 = vmatprep.subr.mxu0 0.0
  %1621 = vmatpush1.msra.mxu0 0.0
  %1622 = vmatprep.subr.mxu0 0.0
  %1623 = vmatpush1.msra.mxu0 0.0
  %1624 = vmatprep.subr.mxu0 0.0
  %1625 = vmatpush1.msra.mxu0 0.0
  %1626 = vmatprep.subr.mxu0 0.0
  %1627 = vmatpush1.msra.mxu0 0.0
  %1628 = vmatprep.subr.mxu0 0.0
  %1629 = vmatpush1.msra.mxu0 0.0
  %1630 = vmatprep.subr.mxu0 0.0
  %1631 = vmatpush1.msra.mxu0 0.0
  %1632 = vmatprep.subr.mxu0 0.0
  %1633 = vmatpush1.msra.mxu0 0.0
  %1634 = vmatprep.subr.mxu0 0.0
  %1635 = vmatpush1.msra.mxu0 0.0
  %1636 = vmatprep.subr.mxu0 0.0
  %1637 = vmatpush1.msra.mxu0 0.0
  %1638 = vmatprep.subr.mxu0 0.0
  %1639 = vmatpush1.msra.mxu0 0.0
  %1640 = vmatprep.subr.mxu0 0.0
  %1641 = vmatpush1.msra.mxu0 0.0
  %1642 = vmatprep.subr.mxu0 0.0
  %1643 = vmatpush1.msra.mxu0 0.0
  %1644 = vmatprep.subr.mxu0 0.0
  %1645 = vmatpush1.msra.mxu0 0.0
  %1646 = vmatprep.subr.mxu0 0.0
  %1647 = vmatpush1.msra.mxu0 0.0
  %1648 = vmatprep.subr.mxu0 0.0
  %1649 = vmatpush1.msra.mxu0 0.0
  %1650 = vmatprep.subr.mxu0 0.0
  %1651 = vmatpush1.msra.mxu0 0.0
  %1652 = vmatprep.subr.mxu0 0.0
  %1653 = vmatpush1.msra.mxu0 0.0
  %1654 = vmatprep.subr.mxu0 0.0
  %1655 = vmatpush1.msra.mxu0 0.0
  %1656 = vmatprep.subr.mxu0 0.0
  %1657 = vmatpush1.msra.mxu0 0.0
  %1658 = vmatprep.subr.mxu0 0.0
  %1659 = vmatpush1.msra.mxu0 0.0
  %1660 = vmatprep.mubr.f32.mxu0 0.0
  %1661 = vmatmul.mubr.f32.gmra.mrb[0].mxu0 %v1591
  %v1662 = vpop.f32.mrb[0].mxu0
  %v1663 = vadd.f32 0.0, %v1662
  %v1664 = vpop.f32.mrb[0].mxu0
  %1665 = vmatprep.mubr.f32.mxu0 0.0
  %1666 = vmatmul.mubr.f32.gmra.mrb[0].mxu0 %v1594
  %v1667 = vpop.f32.mrb[0].mxu0
  %v1668 = vadd.f32 0.0, %v1667
  %v1669 = vpop.f32.mrb[0].mxu0
  %1670 = vdwg.mxu0
  %v1671 = vadd.f32 %v1023, %v1663
  %v1672 = vadd.f32 %v1024, %v1668
  %v1673 = vlaneseq
  %v1674 = vshrl.u32 %v1673, 7
  %v1675 = vsub.s32 3, %v1674
  %v1676 = vrot.slane %v1035, %v1675
  %v1677 = vadd.f32 %v1671, %v1676
  %v1678 = vadd.f32 %v1672, %v1676
  %v1679 = vsel %vm166, %v1677, 0.0
  %1680 = vadd.xlane.f32.xlu0 %v1679
  %v1681 = vpop.xlane.xlu0 %1680
  %v1682 = vsel %vm170, %v1678, 0.0
  %1683 = vadd.xlane.f32.xlu0 %v1682
  %v1684 = vpop.xlane.xlu0 %1683
  %v1685 = vmul.f32 %v1681, %v174
  %v1686 = vmul.f32 %v1684, %v174
  %v1687 = vsub.f32 %v1677, %v1685
  %v1688 = vsub.f32 %v1678, %v1686
  %v1689 = vmul.f32 %v1687, %v1687
  %v1690 = vmul.f32 %v1688, %v1688
  %v1691 = vsel %vm166, %v1689, 0.0
  %1692 = vadd.xlane.f32.xlu0 %v1691
  %v1693 = vpop.xlane.xlu0 %1692
  %v1694 = vsel %vm170, %v1690, 0.0
  %1695 = vadd.xlane.f32.xlu0 %v1694
  %v1696 = vpop.xlane.xlu0 %1695
  %v1697 = vmul.f32 %v1693, %v174
  %v1698 = vmul.f32 %v1696, %v174
  %v1699 = vadd.f32 %v1697, 1e-12
  %v1700 = vadd.f32 %v1698, 1e-12
  %v1701 = vrsqrt.pop %v1699
  %v1702 = vrsqrt.pop %v1700
  %v1703 = vmul.f32 %v1687, %v1701
  %v1704 = vmul.f32 %v1688, %v1702
  %v1705 = vlaneseq
  %v1706 = vshrl.u32 %v1705, 7
  %v1707 = vsub.s32 4, %v1706
  %v1708 = vrot.slane %v1035, %v1707
  %v1709 = vmul.f32 %v1703, %v1708
  %v1710 = vmul.f32 %v1704, %v1708
  %v1711 = vlaneseq
  %v1712 = vshrl.u32 %v1711, 7
  %v1713 = vsub.s32 5, %v1712
  %v1714 = vrot.slane %v1035, %v1713
  %v1715 = vadd.f32 %v1709, %v1714
  %v1716 = vadd.f32 %v1710, %v1714
  %v1717 = vlaneseq
  %v1718 = vshrl.u32 %v1717, 7
  %v1719 = vsub.s32 6, %v1718
  %v1720 = vrot.slane %v1035, %v1719
  %v1722 = vsel %vm166, %v1715, 0
  %v1725 = vsel %vm166, %v1716, 0
  %1727 = vmatprep.subr.mxu0 0.0
  %1728 = vmatpush1.msra.mxu0 %v1027
  %1729 = vmatprep.subr.mxu0 0.0
  %1730 = vmatpush1.msra.mxu0 %v1029
  %1731 = vmatprep.subr.mxu0 0.0
  %1732 = vmatpush1.msra.mxu0 %v1031
  %1733 = vmatprep.subr.mxu0 0.0
  %1734 = vmatpush1.msra.mxu0 %v1033
  %1735 = vmatprep.subr.mxu0 0.0
  %1736 = vmatpush1.msra.mxu0 0.0
  %1737 = vmatprep.subr.mxu0 0.0
  %1738 = vmatpush1.msra.mxu0 0.0
  %1739 = vmatprep.subr.mxu0 0.0
  %1740 = vmatpush1.msra.mxu0 0.0
  %1741 = vmatprep.subr.mxu0 0.0
  %1742 = vmatpush1.msra.mxu0 0.0
  %1743 = vmatprep.subr.mxu0 0.0
  %1744 = vmatpush1.msra.mxu0 0.0
  %1745 = vmatprep.subr.mxu0 0.0
  %1746 = vmatpush1.msra.mxu0 0.0
  %1747 = vmatprep.subr.mxu0 0.0
  %1748 = vmatpush1.msra.mxu0 0.0
  %1749 = vmatprep.subr.mxu0 0.0
  %1750 = vmatpush1.msra.mxu0 0.0
  %1751 = vmatprep.subr.mxu0 0.0
  %1752 = vmatpush1.msra.mxu0 0.0
  %1753 = vmatprep.subr.mxu0 0.0
  %1754 = vmatpush1.msra.mxu0 0.0
  %1755 = vmatprep.subr.mxu0 0.0
  %1756 = vmatpush1.msra.mxu0 0.0
  %1757 = vmatprep.subr.mxu0 0.0
  %1758 = vmatpush1.msra.mxu0 0.0
  %1759 = vmatprep.subr.mxu0 0.0
  %1760 = vmatpush1.msra.mxu0 0.0
  %1761 = vmatprep.subr.mxu0 0.0
  %1762 = vmatpush1.msra.mxu0 0.0
  %1763 = vmatprep.subr.mxu0 0.0
  %1764 = vmatpush1.msra.mxu0 0.0
  %1765 = vmatprep.subr.mxu0 0.0
  %1766 = vmatpush1.msra.mxu0 0.0
  %1767 = vmatprep.subr.mxu0 0.0
  %1768 = vmatpush1.msra.mxu0 0.0
  %1769 = vmatprep.subr.mxu0 0.0
  %1770 = vmatpush1.msra.mxu0 0.0
  %1771 = vmatprep.subr.mxu0 0.0
  %1772 = vmatpush1.msra.mxu0 0.0
  %1773 = vmatprep.subr.mxu0 0.0
  %1774 = vmatpush1.msra.mxu0 0.0
  %1775 = vmatprep.subr.mxu0 0.0
  %1776 = vmatpush1.msra.mxu0 0.0
  %1777 = vmatprep.subr.mxu0 0.0
  %1778 = vmatpush1.msra.mxu0 0.0
  %1779 = vmatprep.subr.mxu0 0.0
  %1780 = vmatpush1.msra.mxu0 0.0
  %1781 = vmatprep.subr.mxu0 0.0
  %1782 = vmatpush1.msra.mxu0 0.0
  %1783 = vmatprep.subr.mxu0 0.0
  %1784 = vmatpush1.msra.mxu0 0.0
  %1785 = vmatprep.subr.mxu0 0.0
  %1786 = vmatpush1.msra.mxu0 0.0
  %1787 = vmatprep.subr.mxu0 0.0
  %1788 = vmatpush1.msra.mxu0 0.0
  %1789 = vmatprep.subr.mxu0 0.0
  %1790 = vmatpush1.msra.mxu0 0.0
  %1791 = vmatprep.mubr.f32.mxu0 0.0
  %1792 = vmatmul.mubr.f32.gmra.mrb[0].mxu0 %v1722
  %v1793 = vpop.f32.mrb[0].mxu0
  %v1794 = vadd.f32 %v1720, %v1793
  %v1795 = vpop.f32.mrb[0].mxu0
  %1796 = vmatprep.mubr.f32.mxu0 0.0
  %1797 = vmatmul.mubr.f32.gmra.mrb[0].mxu0 %v1725
  %v1798 = vpop.f32.mrb[0].mxu0
  %v1799 = vadd.f32 %v1720, %v1798
  %v1800 = vpop.f32.mrb[0].mxu0
  %1801 = vdwg.mxu0
  %v1802 = vmul.f32 %v1794, %v1794
  %v1803 = vmul.f32 %v1799, %v1799
  %v1804 = vmul.f32 %v1794, %v1802
  %v1805 = vmul.f32 %v1799, %v1803
  %v1806 = vmul.f32 %v1804, 0.044715
  %v1807 = vmul.f32 %v1805, 0.044715
  %v1808 = vadd.f32 %v1794, %v1806
  %v1809 = vadd.f32 %v1799, %v1807
  %v1810 = vmul.f32 %v1808, 0.7978846
  %v1811 = vmul.f32 %v1809, 0.7978846
  %v1812 = vtanh.pop %v1810
  %v1813 = vtanh.pop %v1811
  %v1814 = vadd.f32 %v1812, 1.0
  %v1815 = vadd.f32 %v1813, 1.0
  %v1816 = vmul.f32 %v1814, 0.5
  %v1817 = vmul.f32 %v1815, 0.5
  %v1818 = vmul.f32 %v1794, %v1816
  %v1819 = vmul.f32 %v1799, %v1817
  %1820 = vmatprep.subr.mxu0 0.0
  %1821 = vmatpush1.msra.mxu0 %v1036
  %1822 = vmatprep.subr.mxu0 0.0
  %1823 = vmatpush1.msra.mxu0 %v1037
  %1824 = vmatprep.subr.mxu0 0.0
  %1825 = vmatpush1.msra.mxu0 %v1038
  %1826 = vmatprep.subr.mxu0 0.0
  %1827 = vmatpush1.msra.mxu0 %v1039
  %1828 = vmatprep.subr.mxu0 0.0
  %1829 = vmatpush1.msra.mxu0 %v1040
  %1830 = vmatprep.subr.mxu0 0.0
  %1831 = vmatpush1.msra.mxu0 %v1041
  %1832 = vmatprep.subr.mxu0 0.0
  %1833 = vmatpush1.msra.mxu0 %v1042
  %1834 = vmatprep.subr.mxu0 0.0
  %1835 = vmatpush1.msra.mxu0 %v1043
  %1836 = vmatprep.subr.mxu0 0.0
  %1837 = vmatpush1.msra.mxu0 %v1044
  %1838 = vmatprep.subr.mxu0 0.0
  %1839 = vmatpush1.msra.mxu0 %v1045
  %1840 = vmatprep.subr.mxu0 0.0
  %1841 = vmatpush1.msra.mxu0 %v1046
  %1842 = vmatprep.subr.mxu0 0.0
  %1843 = vmatpush1.msra.mxu0 %v1047
  %1844 = vmatprep.subr.mxu0 0.0
  %1845 = vmatpush1.msra.mxu0 %v1048
  %1846 = vmatprep.subr.mxu0 0.0
  %1847 = vmatpush1.msra.mxu0 %v1049
  %1848 = vmatprep.subr.mxu0 0.0
  %1849 = vmatpush1.msra.mxu0 %v1050
  %1850 = vmatprep.subr.mxu0 0.0
  %1851 = vmatpush1.msra.mxu0 %v1051
  %1852 = vmatprep.subr.mxu0 0.0
  %1853 = vmatpush1.msra.mxu0 0.0
  %1854 = vmatprep.subr.mxu0 0.0
  %1855 = vmatpush1.msra.mxu0 0.0
  %1856 = vmatprep.subr.mxu0 0.0
  %1857 = vmatpush1.msra.mxu0 0.0
  %1858 = vmatprep.subr.mxu0 0.0
  %1859 = vmatpush1.msra.mxu0 0.0
  %1860 = vmatprep.subr.mxu0 0.0
  %1861 = vmatpush1.msra.mxu0 0.0
  %1862 = vmatprep.subr.mxu0 0.0
  %1863 = vmatpush1.msra.mxu0 0.0
  %1864 = vmatprep.subr.mxu0 0.0
  %1865 = vmatpush1.msra.mxu0 0.0
  %1866 = vmatprep.subr.mxu0 0.0
  %1867 = vmatpush1.msra.mxu0 0.0
  %1868 = vmatprep.subr.mxu0 0.0
  %1869 = vmatpush1.msra.mxu0 0.0
  %1870 = vmatprep.subr.mxu0 0.0
  %1871 = vmatpush1.msra.mxu0 0.0
  %1872 = vmatprep.subr.mxu0 0.0
  %1873 = vmatpush1.msra.mxu0 0.0
  %1874 = vmatprep.subr.mxu0 0.0
  %1875 = vmatpush1.msra.mxu0 0.0
  %1876 = vmatprep.subr.mxu0 0.0
  %1877 = vmatpush1.msra.mxu0 0.0
  %1878 = vmatprep.subr.mxu0 0.0
  %1879 = vmatpush1.msra.mxu0 0.0
  %1880 = vmatprep.subr.mxu0 0.0
  %1881 = vmatpush1.msra.mxu0 0.0
  %1882 = vmatprep.subr.mxu0 0.0
  %1883 = vmatpush1.msra.mxu0 0.0
  %1884 = vmatprep.mubr.f32.mxu0 0.0
  %1885 = vmatmul.mubr.f32.gmra.mrb[0].mxu0 %v1818
  %v1886 = vpop.f32.mrb[0].mxu0
  %v1887 = vadd.f32 0.0, %v1886
  %v1888 = vpop.f32.mrb[0].mxu0
  %1889 = vmatprep.mubr.f32.mxu0 0.0
  %1890 = vmatmul.mubr.f32.gmra.mrb[0].mxu0 %v1819
  %v1891 = vpop.f32.mrb[0].mxu0
  %v1892 = vadd.f32 0.0, %v1891
  %v1893 = vpop.f32.mrb[0].mxu0
  %1894 = vdwg.mxu0
  %v1895 = vadd.f32 %v1677, %v1887
  %v1896 = vadd.f32 %v1678, %v1892
  %v1897 = vlaneseq
  %v1898 = vshrl.u32 %v1897, 7
  %v1899 = vsub.s32 7, %v1898
  %v1900 = vrot.slane %v1035, %v1899
  %v1901 = vadd.f32 %v1895, %v1900
  %v1902 = vadd.f32 %v1896, %v1900
  %v1903 = vld [vmem:[%s5] sm:$0xff]
  %v1904 = vld [vmem:[%s5 + $0x8] sm:$0xff]
  %v1905 = vld [vmem:[%s5 + $0x10] sm:$0xff]
  %v1906 = vld [vmem:[%s5 + $0x18] sm:$0xff]
  %v1907 = vld [vmem:[%s5 + $0x20] sm:$0xff]
  %v1908 = vld [vmem:[%s5 + $0x28] sm:$0xff]
  %v1909 = vld [vmem:[%s5 + $0x30] sm:$0xff]
  %v1910 = vld [vmem:[%s5 + $0x38] sm:$0xff]
  %v1911 = vld [vmem:[%s5 + $0x40] sm:$0xff]
  %v1912 = vld [vmem:[%s5 + $0x48] sm:$0xff]
  %v1913 = vld [vmem:[%s5 + $0x50] sm:$0xff]
  %v1914 = vld [vmem:[%s5 + $0x58] sm:$0xff]
  %v1915 = vld [vmem:[%s5 + $0x60] sm:$0xff]
  %v1916 = vld [vmem:[%s5 + $0x68] sm:$0xff]
  %v1917 = vld [vmem:[%s5 + $0x70] sm:$0xff]
  %v1918 = vld [vmem:[%s5 + $0x78] sm:$0xff]
  %v1919 = vld [vmem:[%s5 + $0x80] sm:$0xff]
  %v1920 = vld [vmem:[%s5 + $0x88] sm:$0xff]
  %v1921 = vld [vmem:[%s5 + $0x90] sm:$0xff]
  %v1922 = vld [vmem:[%s5 + $0x98] sm:$0xff]
  %v1923 = vld [vmem:[%s5 + $0xa0] sm:$0xf]
  %v1924 = vsel %vm166, %v1901, 0.0
  %1925 = vadd.xlane.f32.xlu0 %v1924
  %v1926 = vpop.xlane.xlu0 %1925
  %v1927 = vsel %vm170, %v1902, 0.0
  %1928 = vadd.xlane.f32.xlu0 %v1927
  %v1929 = vpop.xlane.xlu0 %1928
  %v1930 = vmul.f32 %v1926, %v174
  %v1931 = vmul.f32 %v1929, %v174
  %v1932 = vsub.f32 %v1901, %v1930
  %v1933 = vsub.f32 %v1902, %v1931
  %v1934 = vmul.f32 %v1932, %v1932
  %v1935 = vmul.f32 %v1933, %v1933
  %v1936 = vsel %vm166, %v1934, 0.0
  %1937 = vadd.xlane.f32.xlu0 %v1936
  %v1938 = vpop.xlane.xlu0 %1937
  %v1939 = vsel %vm170, %v1935, 0.0
  %1940 = vadd.xlane.f32.xlu0 %v1939
  %v1941 = vpop.xlane.xlu0 %1940
  %v1942 = vmul.f32 %v1938, %v174
  %v1943 = vmul.f32 %v1941, %v174
  %v1944 = vadd.f32 %v1942, 1e-12
  %v1945 = vadd.f32 %v1943, 1e-12
  %v1946 = vrsqrt.pop %v1944
  %v1947 = vrsqrt.pop %v1945
  %v1948 = vmul.f32 %v1932, %v1946
  %v1949 = vmul.f32 %v1933, %v1947
  %v1950 = vlaneseq
  %v1951 = vshrl.u32 %v1950, 7
  %v1952 = vsub.s32 0, %v1951
  %v1953 = vrot.slane %v1923, %v1952
  %v1954 = vmul.f32 %v1948, %v1953
  %v1955 = vmul.f32 %v1949, %v1953
  %v1956 = vlaneseq
  %v1957 = vshrl.u32 %v1956, 7
  %v1958 = vsub.s32 1, %v1957
  %v1959 = vrot.slane %v1923, %v1958
  %v1960 = vadd.f32 %v1954, %v1959
  %v1961 = vadd.f32 %v1955, %v1959
  %v1962 = vlaneseq
  %v1963 = vshrl.u32 %v1962, 7
  %v1964 = vsub.s32 2, %v1963
  %v1965 = vrot.slane %v1923, %v1964
  %v1967 = vsel %vm166, %v1960, 0
  %v1970 = vsel %vm166, %v1961, 0
  %1972 = vmatprep.subr.mxu0 0.0
  %1973 = vmatpush1.msra.mxu0 %v1903
  %1974 = vmatprep.subr.mxu0 0.0
  %1975 = vmatpush1.msra.mxu0 %v1904
  %1976 = vmatprep.subr.mxu0 0.0
  %1977 = vmatpush1.msra.mxu0 %v1905
  %1978 = vmatprep.subr.mxu0 0.0
  %1979 = vmatpush1.msra.mxu0 %v1906
  %1980 = vmatprep.subr.mxu0 0.0
  %1981 = vmatpush1.msra.mxu0 0.0
  %1982 = vmatprep.subr.mxu0 0.0
  %1983 = vmatpush1.msra.mxu0 0.0
  %1984 = vmatprep.subr.mxu0 0.0
  %1985 = vmatpush1.msra.mxu0 0.0
  %1986 = vmatprep.subr.mxu0 0.0
  %1987 = vmatpush1.msra.mxu0 0.0
  %1988 = vmatprep.subr.mxu0 0.0
  %1989 = vmatpush1.msra.mxu0 0.0
  %1990 = vmatprep.subr.mxu0 0.0
  %1991 = vmatpush1.msra.mxu0 0.0
  %1992 = vmatprep.subr.mxu0 0.0
  %1993 = vmatpush1.msra.mxu0 0.0
  %1994 = vmatprep.subr.mxu0 0.0
  %1995 = vmatpush1.msra.mxu0 0.0
  %1996 = vmatprep.subr.mxu0 0.0
  %1997 = vmatpush1.msra.mxu0 0.0
  %1998 = vmatprep.subr.mxu0 0.0
  %1999 = vmatpush1.msra.mxu0 0.0
  %2000 = vmatprep.subr.mxu0 0.0
  %2001 = vmatpush1.msra.mxu0 0.0
  %2002 = vmatprep.subr.mxu0 0.0
  %2003 = vmatpush1.msra.mxu0 0.0
  %2004 = vmatprep.subr.mxu0 0.0
  %2005 = vmatpush1.msra.mxu0 0.0
  %2006 = vmatprep.subr.mxu0 0.0
  %2007 = vmatpush1.msra.mxu0 0.0
  %2008 = vmatprep.subr.mxu0 0.0
  %2009 = vmatpush1.msra.mxu0 0.0
  %2010 = vmatprep.subr.mxu0 0.0
  %2011 = vmatpush1.msra.mxu0 0.0
  %2012 = vmatprep.subr.mxu0 0.0
  %2013 = vmatpush1.msra.mxu0 0.0
  %2014 = vmatprep.subr.mxu0 0.0
  %2015 = vmatpush1.msra.mxu0 0.0
  %2016 = vmatprep.subr.mxu0 0.0
  %2017 = vmatpush1.msra.mxu0 0.0
  %2018 = vmatprep.subr.mxu0 0.0
  %2019 = vmatpush1.msra.mxu0 0.0
  %2020 = vmatprep.subr.mxu0 0.0
  %2021 = vmatpush1.msra.mxu0 0.0
  %2022 = vmatprep.subr.mxu0 0.0
  %2023 = vmatpush1.msra.mxu0 0.0
  %2024 = vmatprep.subr.mxu0 0.0
  %2025 = vmatpush1.msra.mxu0 0.0
  %2026 = vmatprep.subr.mxu0 0.0
  %2027 = vmatpush1.msra.mxu0 0.0
  %2028 = vmatprep.subr.mxu0 0.0
  %2029 = vmatpush1.msra.mxu0 0.0
  %2030 = vmatprep.subr.mxu0 0.0
  %2031 = vmatpush1.msra.mxu0 0.0
  %2032 = vmatprep.subr.mxu0 0.0
  %2033 = vmatpush1.msra.mxu0 0.0
  %2034 = vmatprep.subr.mxu0 0.0
  %2035 = vmatpush1.msra.mxu0 0.0
  %2036 = vmatprep.mubr.f32.mxu0 0.0
  %2037 = vmatmul.mubr.f32.gmra.mrb[0].mxu0 %v1967
  %v2038 = vpop.f32.mrb[0].mxu0
  %v2039 = vadd.f32 %v1965, %v2038
  %v2040 = vpop.f32.mrb[0].mxu0
  %2041 = vmatprep.mubr.f32.mxu0 0.0
  %2042 = vmatmul.mubr.f32.gmra.mrb[0].mxu0 %v1970
  %v2043 = vpop.f32.mrb[0].mxu0
  %v2044 = vadd.f32 %v1965, %v2043
  %v2045 = vpop.f32.mrb[0].mxu0
  %2046 = vdwg.mxu0
  %v2047 = vmax.f32 %v2039, 0.0
  %v2048 = vmax.f32 %v2044, 0.0
  %v2049 = vlaneseq
  %v2050 = vshrl.u32 %v2049, 7
  %v2051 = vsub.s32 3, %v2050
  %v2052 = vrot.slane %v1923, %v2051
  %2053 = vmatprep.subr.mxu0 0.0
  %2054 = vmatpush1.msra.mxu0 %v1907
  %2055 = vmatprep.subr.mxu0 0.0
  %2056 = vmatpush1.msra.mxu0 %v1908
  %2057 = vmatprep.subr.mxu0 0.0
  %2058 = vmatpush1.msra.mxu0 %v1909
  %2059 = vmatprep.subr.mxu0 0.0
  %2060 = vmatpush1.msra.mxu0 %v1910
  %2061 = vmatprep.subr.mxu0 0.0
  %2062 = vmatpush1.msra.mxu0 %v1911
  %2063 = vmatprep.subr.mxu0 0.0
  %2064 = vmatpush1.msra.mxu0 %v1912
  %2065 = vmatprep.subr.mxu0 0.0
  %2066 = vmatpush1.msra.mxu0 %v1913
  %2067 = vmatprep.subr.mxu0 0.0
  %2068 = vmatpush1.msra.mxu0 %v1914
  %2069 = vmatprep.subr.mxu0 0.0
  %2070 = vmatpush1.msra.mxu0 %v1915
  %2071 = vmatprep.subr.mxu0 0.0
  %2072 = vmatpush1.msra.mxu0 %v1916
  %2073 = vmatprep.subr.mxu0 0.0
  %2074 = vmatpush1.msra.mxu0 %v1917
  %2075 = vmatprep.subr.mxu0 0.0
  %2076 = vmatpush1.msra.mxu0 %v1918
  %2077 = vmatprep.subr.mxu0 0.0
  %2078 = vmatpush1.msra.mxu0 %v1919
  %2079 = vmatprep.subr.mxu0 0.0
  %2080 = vmatpush1.msra.mxu0 %v1920
  %2081 = vmatprep.subr.mxu0 0.0
  %2082 = vmatpush1.msra.mxu0 %v1921
  %2083 = vmatprep.subr.mxu0 0.0
  %2084 = vmatpush1.msra.mxu0 %v1922
  %2085 = vmatprep.subr.mxu0 0.0
  %2086 = vmatpush1.msra.mxu0 0.0
  %2087 = vmatprep.subr.mxu0 0.0
  %2088 = vmatpush1.msra.mxu0 0.0
  %2089 = vmatprep.subr.mxu0 0.0
  %2090 = vmatpush1.msra.mxu0 0.0
  %2091 = vmatprep.subr.mxu0 0.0
  %2092 = vmatpush1.msra.mxu0 0.0
  %2093 = vmatprep.subr.mxu0 0.0
  %2094 = vmatpush1.msra.mxu0 0.0
  %2095 = vmatprep.subr.mxu0 0.0
  %2096 = vmatpush1.msra.mxu0 0.0
  %2097 = vmatprep.subr.mxu0 0.0
  %2098 = vmatpush1.msra.mxu0 0.0
  %2099 = vmatprep.subr.mxu0 0.0
  %2100 = vmatpush1.msra.mxu0 0.0
  %2101 = vmatprep.subr.mxu0 0.0
  %2102 = vmatpush1.msra.mxu0 0.0
  %2103 = vmatprep.subr.mxu0 0.0
  %2104 = vmatpush1.msra.mxu0 0.0
  %2105 = vmatprep.subr.mxu0 0.0
  %2106 = vmatpush1.msra.mxu0 0.0
  %2107 = vmatprep.subr.mxu0 0.0
  %2108 = vmatpush1.msra.mxu0 0.0
  %2109 = vmatprep.subr.mxu0 0.0
  %2110 = vmatpush1.msra.mxu0 0.0
  %2111 = vmatprep.subr.mxu0 0.0
  %2112 = vmatpush1.msra.mxu0 0.0
  %2113 = vmatprep.subr.mxu0 0.0
  %2114 = vmatpush1.msra.mxu0 0.0
  %2115 = vmatprep.subr.mxu0 0.0
  %2116 = vmatpush1.msra.mxu0 0.0
  %2117 = vmatprep.mubr.f32.mxu0 0.0
  %2118 = vmatmul.mubr.f32.gmra.mrb[0].mxu0 %v2047
  %v2119 = vpop.f32.mrb[0].mxu0
  %v2120 = vadd.f32 %v2052, %v2119
  %v2121 = vpop.f32.mrb[0].mxu0
  %2122 = vmatprep.mubr.f32.mxu0 0.0
  %2123 = vmatmul.mubr.f32.gmra.mrb[0].mxu0 %v2048
  %v2124 = vpop.f32.mrb[0].mxu0
  %v2125 = vadd.f32 %v2052, %v2124
  %v2126 = vpop.f32.mrb[0].mxu0
  %2127 = vdwg.mxu0
  %2128 = vmax.xlane.f32.xlu0 %v2120
  %v2129 = vpop.xlane.xlu0 %2128
  %v2130 = vsel %vm294, %v2125, -inf
  %2131 = vmax.xlane.f32.xlu0 %v2130
  %v2132 = vpop.xlane.xlu0 %2131
  %v2133 = vsub.f32 %v2120, %v2129
  %v2134 = vsub.f32 %v2125, %v2132
  %v2135 = vmul.f32 %v2133, 1.442695
  %v2136 = vpow.pop %v2135
  %v2137 = vmul.f32 %v2134, 1.442695
  %v2138 = vpow.pop %v2137
  %2139 = vadd.xlane.f32.xlu0 %v2136
  %v2140 = vpop.xlane.xlu0 %2139
  %v2141 = vsel %vm294, %v2138, 0.0
  %2142 = vadd.xlane.f32.xlu0 %v2141
  %v2143 = vpop.xlane.xlu0 %2142
  %v2144 = vlog2.pop %v2140
  %v2145 = vmul.f32 %v2144, 0.6931472
  %v2146 = vlog2.pop %v2143
  %v2147 = vmul.f32 %v2146, 0.6931472
  %v2148 = vadd.f32 %v2129, %v2145
  %v2149 = vadd.f32 %v2132, %v2147
  %v2150 = vsub.f32 %v2120, %v2148
  %v2151 = vsub.f32 %v2125, %v2149
  %2152 = vst [vmem:[%s6] sm:$0xff] %v2150
  %2153 = vst [vmem:[%s6 + $0x8] sm:$0xf] %v2151
  // Predicated region
  $region26: #{deit_forward.1} parent=0 // pred_check
    _
  $region27: #{deit_forward.1} parent=0 // pred_check_branch
    %2155 = sbr.rel (0) target = $region29
  $region28: #{deit_forward.1} parent=0 // pred_region
    _
  $region29: #{deit_forward.1} parent=0 // pred_fallthru
    _
  // Predicated region
  $region30: #{deit_forward.1} parent=0 // pred_check
    _
  $region31: #{deit_forward.1} parent=0 // pred_check_branch
    %2157 = sbr.rel (0) target = $region33
  $region32: #{deit_forward.1} parent=0 // pred_region
    _
  $region33: #{deit_forward.1} parent=0 // pred_fallthru
    _

</llo_original>
